<compile_context>
chip_gen: v7x
topology: tpu7x:2x2x1
jax: 0.10.0
libtpu: 0.0.40
codegen_flags: <defaults>
</compile_context>

<pallas_src>
import functools

import jax
import jax.numpy as jnp
from jax.experimental import pallas as pl
from jax.experimental.pallas import tpu as pltpu

N_FEATURES = 4
LAYER_DIMS = [N_FEATURES, 200, 100, 50, 3, 50, 100, 200, N_FEATURES]  # 8 Linear layers
_SMALL_K = 8  # contraction dims <= this skip the MXU entirely


def _ae_kernel(x_ref, *refs):
    """refs = (w1, b1, w2, b2, ..., w8, b8, out_ref).

    Activations are (features, batch_tile): lane axis = batch (lane-dense I/O),
    sublane axis = features.
    """
    out_ref = refs[-1]
    param_refs = refs[:-1]
    n_layers = len(param_refs) // 2

    h = x_ref[...].astype(jnp.float32)                # (F, tb)
    for layer in range(n_layers):
        w = param_refs[2 * layer][...]                # (out, in)  bf16 or f32
        b = param_refs[2 * layer + 1][...]            # (out, 1)   f32
        k = w.shape[1]
        if k <= _SMALL_K:
            # K = 3 or 4: a single MXU pass would waste >=96% of the
            # contraction; do it as K broadcast-multiply-adds on the VPU.
            wf = w.astype(jnp.float32)
            acc = wf[:, 0:1] * h[0:1, :]
            for kk in range(1, k):
                acc = acc + wf[:, kk:kk + 1] * h[kk:kk + 1, :]
        else:
            # bf16 operands, f32 accumulation on the MXU.
            acc = jnp.dot(
                w.astype(jnp.bfloat16),
                h.astype(jnp.bfloat16),
                preferred_element_type=jnp.float32,
            )
        h = acc + b                                   # bias + tanh stay in f32
        # tanh after every layer except the very last (decode() applies tanh
        # to z first, so tanh effectively sits between every pair of Linears).
        if layer != n_layers - 1:
            h = jnp.tanh(h)
    out_ref[...] = h.astype(out_ref.dtype)


def _round_up(n, m):
    return ((n + m - 1) // m) * m


def _pick_batch_tile(batch, tile_b):
    """Lane-aligned batch tile; prefer >=2 grid steps so v7x megacore shards."""
    b128 = _round_up(batch, 128)
    tb = min(tile_b, b128)
    if 128 < b128 <= tile_b:
        # Whole batch would fit in one tile -> split into two grid steps.
        tb = _round_up(-(-b128 // 2), 128)
    return max(128, (tb // 128) * 128)


@functools.partial(jax.jit, static_argnames=("tile_b",))
def ae_3d_200_forward(x, params, tile_b=2048):
    """x: (B, n_features) f32.
    params: flat list [w1, b1, ..., w8, b8], w_i: (out, in), b_i: (out, 1)
    (i.e. PyTorch nn.Linear layout)."""
    B, F = x.shape
    assert F == N_FEATURES

    # Cast MXU-bound weights (in_features > _SMALL_K) to bf16; biases and the
    # tiny-K weights stay f32.
    params_c = []
    for idx, p in enumerate(params):
        if idx % 2 == 0 and p.shape[1] > _SMALL_K:
            params_c.append(p.astype(jnp.bfloat16))
        else:
            params_c.append(p.astype(jnp.float32))

    tb = _pick_batch_tile(B, tile_b)
    Bp = _round_up(B, tb)

    # Batch on lanes: (F, Bp); pad batch up to a multiple of the tile.
    x_t = jnp.pad(x.astype(jnp.float32).T, ((0, 0), (0, Bp - B)))

    in_specs = [pl.BlockSpec((F, tb), lambda i: (0, i))]
    for p in params_c:
        # Whole weight/bias as one resident block.  Bind ndim eagerly to avoid
        # the late-binding lambda pitfall.
        in_specs.append(pl.BlockSpec(p.shape, lambda i, nd=p.ndim: (0,) * nd))

    out = pl.pallas_call(
        _ae_kernel,
        out_shape=jax.ShapeDtypeStruct((F, Bp), jnp.float32),
        grid_spec=pltpu.PrefetchScalarGridSpec(
            num_scalar_prefetch=0,
            grid=(Bp // tb,),
            in_specs=in_specs,
            out_specs=pl.BlockSpec((F, tb), lambda i: (0, i)),
        ),
        compiler_params=pltpu.CompilerParams(
            dimension_semantics=("parallel",),
            # NOTE: if tile_b is raised above ~4096, also set vmem_limit_bytes
            # (spilled (tb, 200) f32 intermediates grow with the tile).
        ),
    )(x_t, *params_c)

    return out[:, :B].T


def init_params(key):
    """Deterministic init mimicking PyTorch nn.Linear default (uniform +-1/sqrt(fan_in)),
    stored in PyTorch layout: W (out, in), b (out, 1)."""
    params = []
    for i in range(len(LAYER_DIMS) - 1):
        fan_in, fan_out = LAYER_DIMS[i], LAYER_DIMS[i + 1]
        key, kw, kb = jax.random.split(key, 3)
        bound = 1.0 / jnp.sqrt(jnp.float32(fan_in))
        w = jax.random.uniform(kw, (fan_out, fan_in), jnp.float32, -bound, bound)
        b = jax.random.uniform(kb, (fan_out, 1), jnp.float32, -bound, bound)
        params.append(w)
        params.append(b)
    return params


def _reference_forward(x, params):
    """Pure-JAX f32 reference matching the PyTorch forward."""
    h = x
    n_layers = len(params) // 2
    for layer in range(n_layers):
        w = params[2 * layer]        # (out, in)
        b = params[2 * layer + 1]    # (out, 1)
        h = h @ w.T + b[:, 0]
        if layer != n_layers - 1:
            h = jnp.tanh(h)
    return h


if __name__ == "__main__":
    key = jax.random.PRNGKey(0)
    key, kx_small, kx_big = jax.random.split(key, 3)
    params = init_params(key)

    # Small shape + a shape that exercises multiple grid steps / batch padding.
    for batch, kx in ((8, kx_small), (300, kx_big)):
        x = jax.random.normal(kx, (batch, N_FEATURES), jnp.float32)
        out = ae_3d_200_forward(x, params)
        jax.block_until_ready(out)

        ref = _reference_forward(x, params)
        assert out.shape == (batch, N_FEATURES)
        # bf16 MXU operands -> loosened tolerance vs the f32 reference.
        max_err = float(jnp.max(jnp.abs(out - ref)))
        assert jnp.allclose(out, ref, atol=3e-2, rtol=3e-2), (
            f"mismatch vs JAX reference (batch={batch}, max abs err={max_err})"
        )

    print("KERNEL_OK")
</pallas_src>

<mosaic_0001>
module attributes {stable_mosaic.version = 11 : i64} {
  func.func @_ae_kernel(%arg0: i32, %arg1: memref<4x128xf32, #tpu.memory_space<vmem>>, %arg2: memref<200x4xf32, #tpu.memory_space<vmem>>, %arg3: memref<200x1xf32, #tpu.memory_space<vmem>>, %arg4: memref<100x200xbf16, #tpu.memory_space<vmem>>, %arg5: memref<100x1xf32, #tpu.memory_space<vmem>>, %arg6: memref<50x100xbf16, #tpu.memory_space<vmem>>, %arg7: memref<50x1xf32, #tpu.memory_space<vmem>>, %arg8: memref<3x50xbf16, #tpu.memory_space<vmem>>, %arg9: memref<3x1xf32, #tpu.memory_space<vmem>>, %arg10: memref<50x3xf32, #tpu.memory_space<vmem>>, %arg11: memref<50x1xf32, #tpu.memory_space<vmem>>, %arg12: memref<100x50xbf16, #tpu.memory_space<vmem>>, %arg13: memref<100x1xf32, #tpu.memory_space<vmem>>, %arg14: memref<200x100xbf16, #tpu.memory_space<vmem>>, %arg15: memref<200x1xf32, #tpu.memory_space<vmem>>, %arg16: memref<4x200xbf16, #tpu.memory_space<vmem>>, %arg17: memref<4x1xf32, #tpu.memory_space<vmem>>, %arg18: memref<4x128xf32, #tpu.memory_space<vmem>>) attributes {dimension_semantics = [#tpu.dimension_semantics<parallel>], iteration_bounds = array<i64: 1>, scalar_prefetch = 0 : i64, scratch_operands = 0 : i64, tpu.core_type = #tpu.core_type<tc>, window_params = [{transform_indices = @transform_0, window_bounds = array<i64: 4, 128>}, {pipeline_mode = #tpu.pipeline_mode<synchronous>, transform_indices = @transform_1, window_bounds = array<i64: 200, 4>}, {pipeline_mode = #tpu.pipeline_mode<synchronous>, transform_indices = @transform_2, window_bounds = array<i64: 200, 1>}, {pipeline_mode = #tpu.pipeline_mode<synchronous>, transform_indices = @transform_3, window_bounds = array<i64: 100, 200>}, {pipeline_mode = #tpu.pipeline_mode<synchronous>, transform_indices = @transform_4, window_bounds = array<i64: 100, 1>}, {pipeline_mode = #tpu.pipeline_mode<synchronous>, transform_indices = @transform_5, window_bounds = array<i64: 50, 100>}, {pipeline_mode = #tpu.pipeline_mode<synchronous>, transform_indices = @transform_6, window_bounds = array<i64: 50, 1>}, {pipeline_mode = #tpu.pipeline_mode<synchronous>, transform_indices = @transform_7, window_bounds = array<i64: 3, 50>}, {pipeline_mode = #tpu.pipeline_mode<synchronous>, transform_indices = @transform_8, window_bounds = array<i64: 3, 1>}, {pipeline_mode = #tpu.pipeline_mode<synchronous>, transform_indices = @transform_9, window_bounds = array<i64: 50, 3>}, {pipeline_mode = #tpu.pipeline_mode<synchronous>, transform_indices = @transform_10, window_bounds = array<i64: 50, 1>}, {pipeline_mode = #tpu.pipeline_mode<synchronous>, transform_indices = @transform_11, window_bounds = array<i64: 100, 50>}, {pipeline_mode = #tpu.pipeline_mode<synchronous>, transform_indices = @transform_12, window_bounds = array<i64: 100, 1>}, {pipeline_mode = #tpu.pipeline_mode<synchronous>, transform_indices = @transform_13, window_bounds = array<i64: 200, 100>}, {pipeline_mode = #tpu.pipeline_mode<synchronous>, transform_indices = @transform_14, window_bounds = array<i64: 200, 1>}, {pipeline_mode = #tpu.pipeline_mode<synchronous>, transform_indices = @transform_15, window_bounds = array<i64: 4, 200>}, {pipeline_mode = #tpu.pipeline_mode<synchronous>, transform_indices = @transform_16, window_bounds = array<i64: 4, 1>}, {transform_indices = @transform_17, window_bounds = array<i64: 4, 128>}]} {
    %c0 = arith.constant 0 : index
    %c0_0 = arith.constant 0 : index
    %0 = vector.load %arg1[%c0, %c0_0] : memref<4x128xf32, #tpu.memory_space<vmem>>, vector<4x128xf32>
    %c0_1 = arith.constant 0 : index
    %c0_2 = arith.constant 0 : index
    %1 = vector.load %arg2[%c0_1, %c0_2] : memref<200x4xf32, #tpu.memory_space<vmem>>, vector<200x4xf32>
    %c0_3 = arith.constant 0 : index
    %c0_4 = arith.constant 0 : index
    %2 = vector.load %arg3[%c0_3, %c0_4] : memref<200x1xf32, #tpu.memory_space<vmem>>, vector<200x1xf32>
    %3 = vector.extract_strided_slice %1 {offsets = [0, 0], sizes = [200, 1], strides = [1, 1]} : vector<200x4xf32> to vector<200x1xf32>
    %4 = vector.extract_strided_slice %0 {offsets = [0, 0], sizes = [1, 128], strides = [1, 1]} : vector<4x128xf32> to vector<1x128xf32>
    %5 = vector.broadcast %3 : vector<200x1xf32> to vector<200x128xf32>
    %6 = vector.broadcast %4 : vector<1x128xf32> to vector<200x128xf32>
    %7 = arith.mulf %5, %6 : vector<200x128xf32>
    %8 = vector.extract_strided_slice %1 {offsets = [0, 1], sizes = [200, 1], strides = [1, 1]} : vector<200x4xf32> to vector<200x1xf32>
    %9 = vector.extract_strided_slice %0 {offsets = [1, 0], sizes = [1, 128], strides = [1, 1]} : vector<4x128xf32> to vector<1x128xf32>
    %10 = vector.broadcast %8 : vector<200x1xf32> to vector<200x128xf32>
    %11 = vector.broadcast %9 : vector<1x128xf32> to vector<200x128xf32>
    %12 = arith.mulf %10, %11 : vector<200x128xf32>
    %13 = arith.addf %7, %12 : vector<200x128xf32>
    %14 = vector.extract_strided_slice %1 {offsets = [0, 2], sizes = [200, 1], strides = [1, 1]} : vector<200x4xf32> to vector<200x1xf32>
    %15 = vector.extract_strided_slice %0 {offsets = [2, 0], sizes = [1, 128], strides = [1, 1]} : vector<4x128xf32> to vector<1x128xf32>
    %16 = vector.broadcast %14 : vector<200x1xf32> to vector<200x128xf32>
    %17 = vector.broadcast %15 : vector<1x128xf32> to vector<200x128xf32>
    %18 = arith.mulf %16, %17 : vector<200x128xf32>
    %19 = arith.addf %13, %18 : vector<200x128xf32>
    %20 = vector.extract_strided_slice %1 {offsets = [0, 3], sizes = [200, 1], strides = [1, 1]} : vector<200x4xf32> to vector<200x1xf32>
    %21 = vector.extract_strided_slice %0 {offsets = [3, 0], sizes = [1, 128], strides = [1, 1]} : vector<4x128xf32> to vector<1x128xf32>
    %22 = vector.broadcast %20 : vector<200x1xf32> to vector<200x128xf32>
    %23 = vector.broadcast %21 : vector<1x128xf32> to vector<200x128xf32>
    %24 = arith.mulf %22, %23 : vector<200x128xf32>
    %25 = arith.addf %19, %24 : vector<200x128xf32>
    %26 = vector.broadcast %2 : vector<200x1xf32> to vector<200x128xf32>
    %27 = arith.addf %25, %26 : vector<200x128xf32>
    %28 = math.tanh %27 : vector<200x128xf32>
    %c0_5 = arith.constant 0 : index
    %c0_6 = arith.constant 0 : index
    %29 = vector.load %arg4[%c0_5, %c0_6] : memref<100x200xbf16, #tpu.memory_space<vmem>>, vector<100x200xbf16>
    %c0_7 = arith.constant 0 : index
    %c0_8 = arith.constant 0 : index
    %30 = vector.load %arg5[%c0_7, %c0_8] : memref<100x1xf32, #tpu.memory_space<vmem>>, vector<100x1xf32>
    %31 = arith.truncf %28 : vector<200x128xf32> to vector<200x128xbf16>
    %cst = arith.constant dense<0.000000e+00> : vector<100x128xf32>
    %32 = tpu.matmul %29, %31, %cst {dimension_numbers = #tpu.dot_dimension_numbers<[1], [0], [0], [1], [0, 0, 1, 1], [], []>} : vector<100x200xbf16>, vector<200x128xbf16>, vector<100x128xf32> -> vector<100x128xf32>
    %33 = vector.broadcast %30 : vector<100x1xf32> to vector<100x128xf32>
    %34 = arith.addf %32, %33 : vector<100x128xf32>
    %35 = math.tanh %34 : vector<100x128xf32>
    %c0_9 = arith.constant 0 : index
    %c0_10 = arith.constant 0 : index
    %36 = vector.load %arg6[%c0_9, %c0_10] : memref<50x100xbf16, #tpu.memory_space<vmem>>, vector<50x100xbf16>
    %c0_11 = arith.constant 0 : index
    %c0_12 = arith.constant 0 : index
    %37 = vector.load %arg7[%c0_11, %c0_12] : memref<50x1xf32, #tpu.memory_space<vmem>>, vector<50x1xf32>
    %38 = arith.truncf %35 : vector<100x128xf32> to vector<100x128xbf16>
    %cst_13 = arith.constant dense<0.000000e+00> : vector<50x128xf32>
    %39 = tpu.matmul %36, %38, %cst_13 {dimension_numbers = #tpu.dot_dimension_numbers<[1], [0], [0], [1], [0, 0, 1, 1], [], []>} : vector<50x100xbf16>, vector<100x128xbf16>, vector<50x128xf32> -> vector<50x128xf32>
    %40 = vector.broadcast %37 : vector<50x1xf32> to vector<50x128xf32>
    %41 = arith.addf %39, %40 : vector<50x128xf32>
    %42 = math.tanh %41 : vector<50x128xf32>
    %c0_14 = arith.constant 0 : index
    %c0_15 = arith.constant 0 : index
    %43 = vector.load %arg8[%c0_14, %c0_15] : memref<3x50xbf16, #tpu.memory_space<vmem>>, vector<3x50xbf16>
    %c0_16 = arith.constant 0 : index
    %c0_17 = arith.constant 0 : index
    %44 = vector.load %arg9[%c0_16, %c0_17] : memref<3x1xf32, #tpu.memory_space<vmem>>, vector<3x1xf32>
    %45 = arith.truncf %42 : vector<50x128xf32> to vector<50x128xbf16>
    %cst_18 = arith.constant dense<0.000000e+00> : vector<3x128xf32>
    %46 = tpu.matmul %43, %45, %cst_18 {dimension_numbers = #tpu.dot_dimension_numbers<[1], [0], [0], [1], [0, 0, 1, 1], [], []>} : vector<3x50xbf16>, vector<50x128xbf16>, vector<3x128xf32> -> vector<3x128xf32>
    %47 = vector.broadcast %44 : vector<3x1xf32> to vector<3x128xf32>
    %48 = arith.addf %46, %47 : vector<3x128xf32>
    %49 = math.tanh %48 : vector<3x128xf32>
    %c0_19 = arith.constant 0 : index
    %c0_20 = arith.constant 0 : index
    %50 = vector.load %arg10[%c0_19, %c0_20] : memref<50x3xf32, #tpu.memory_space<vmem>>, vector<50x3xf32>
    %c0_21 = arith.constant 0 : index
    %c0_22 = arith.constant 0 : index
    %51 = vector.load %arg11[%c0_21, %c0_22] : memref<50x1xf32, #tpu.memory_space<vmem>>, vector<50x1xf32>
    %52 = vector.extract_strided_slice %50 {offsets = [0, 0], sizes = [50, 1], strides = [1, 1]} : vector<50x3xf32> to vector<50x1xf32>
    %53 = vector.extract_strided_slice %49 {offsets = [0, 0], sizes = [1, 128], strides = [1, 1]} : vector<3x128xf32> to vector<1x128xf32>
    %54 = vector.broadcast %52 : vector<50x1xf32> to vector<50x128xf32>
    %55 = vector.broadcast %53 : vector<1x128xf32> to vector<50x128xf32>
    %56 = arith.mulf %54, %55 : vector<50x128xf32>
    %57 = vector.extract_strided_slice %50 {offsets = [0, 1], sizes = [50, 1], strides = [1, 1]} : vector<50x3xf32> to vector<50x1xf32>
    %58 = vector.extract_strided_slice %49 {offsets = [1, 0], sizes = [1, 128], strides = [1, 1]} : vector<3x128xf32> to vector<1x128xf32>
    %59 = vector.broadcast %57 : vector<50x1xf32> to vector<50x128xf32>
    %60 = vector.broadcast %58 : vector<1x128xf32> to vector<50x128xf32>
    %61 = arith.mulf %59, %60 : vector<50x128xf32>
    %62 = arith.addf %56, %61 : vector<50x128xf32>
    %63 = vector.extract_strided_slice %50 {offsets = [0, 2], sizes = [50, 1], strides = [1, 1]} : vector<50x3xf32> to vector<50x1xf32>
    %64 = vector.extract_strided_slice %49 {offsets = [2, 0], sizes = [1, 128], strides = [1, 1]} : vector<3x128xf32> to vector<1x128xf32>
    %65 = vector.broadcast %63 : vector<50x1xf32> to vector<50x128xf32>
    %66 = vector.broadcast %64 : vector<1x128xf32> to vector<50x128xf32>
    %67 = arith.mulf %65, %66 : vector<50x128xf32>
    %68 = arith.addf %62, %67 : vector<50x128xf32>
    %69 = vector.broadcast %51 : vector<50x1xf32> to vector<50x128xf32>
    %70 = arith.addf %68, %69 : vector<50x128xf32>
    %71 = math.tanh %70 : vector<50x128xf32>
    %c0_23 = arith.constant 0 : index
    %c0_24 = arith.constant 0 : index
    %72 = vector.load %arg12[%c0_23, %c0_24] : memref<100x50xbf16, #tpu.memory_space<vmem>>, vector<100x50xbf16>
    %c0_25 = arith.constant 0 : index
    %c0_26 = arith.constant 0 : index
    %73 = vector.load %arg13[%c0_25, %c0_26] : memref<100x1xf32, #tpu.memory_space<vmem>>, vector<100x1xf32>
    %74 = arith.truncf %71 : vector<50x128xf32> to vector<50x128xbf16>
    %cst_27 = arith.constant dense<0.000000e+00> : vector<100x128xf32>
    %75 = tpu.matmul %72, %74, %cst_27 {dimension_numbers = #tpu.dot_dimension_numbers<[1], [0], [0], [1], [0, 0, 1, 1], [], []>} : vector<100x50xbf16>, vector<50x128xbf16>, vector<100x128xf32> -> vector<100x128xf32>
    %76 = vector.broadcast %73 : vector<100x1xf32> to vector<100x128xf32>
    %77 = arith.addf %75, %76 : vector<100x128xf32>
    %78 = math.tanh %77 : vector<100x128xf32>
    %c0_28 = arith.constant 0 : index
    %c0_29 = arith.constant 0 : index
    %79 = vector.load %arg14[%c0_28, %c0_29] : memref<200x100xbf16, #tpu.memory_space<vmem>>, vector<200x100xbf16>
    %c0_30 = arith.constant 0 : index
    %c0_31 = arith.constant 0 : index
    %80 = vector.load %arg15[%c0_30, %c0_31] : memref<200x1xf32, #tpu.memory_space<vmem>>, vector<200x1xf32>
    %81 = arith.truncf %78 : vector<100x128xf32> to vector<100x128xbf16>
    %cst_32 = arith.constant dense<0.000000e+00> : vector<200x128xf32>
    %82 = tpu.matmul %79, %81, %cst_32 {dimension_numbers = #tpu.dot_dimension_numbers<[1], [0], [0], [1], [0, 0, 1, 1], [], []>} : vector<200x100xbf16>, vector<100x128xbf16>, vector<200x128xf32> -> vector<200x128xf32>
    %83 = vector.broadcast %80 : vector<200x1xf32> to vector<200x128xf32>
    %84 = arith.addf %82, %83 : vector<200x128xf32>
    %85 = math.tanh %84 : vector<200x128xf32>
    %c0_33 = arith.constant 0 : index
    %c0_34 = arith.constant 0 : index
    %86 = vector.load %arg16[%c0_33, %c0_34] : memref<4x200xbf16, #tpu.memory_space<vmem>>, vector<4x200xbf16>
    %c0_35 = arith.constant 0 : index
    %c0_36 = arith.constant 0 : index
    %87 = vector.load %arg17[%c0_35, %c0_36] : memref<4x1xf32, #tpu.memory_space<vmem>>, vector<4x1xf32>
    %88 = arith.truncf %85 : vector<200x128xf32> to vector<200x128xbf16>
    %cst_37 = arith.constant dense<0.000000e+00> : vector<4x128xf32>
    %89 = tpu.matmul %86, %88, %cst_37 {dimension_numbers = #tpu.dot_dimension_numbers<[1], [0], [0], [1], [0, 0, 1, 1], [], []>} : vector<4x200xbf16>, vector<200x128xbf16>, vector<4x128xf32> -> vector<4x128xf32>
    %90 = vector.broadcast %87 : vector<4x1xf32> to vector<4x128xf32>
    %91 = arith.addf %89, %90 : vector<4x128xf32>
    %c0_38 = arith.constant 0 : index
    %c0_39 = arith.constant 0 : index
    %92 = vector.load %arg18[%c0_38, %c0_39] : memref<4x128xf32, #tpu.memory_space<vmem>>, vector<4x128xf32>
    tpu.vector_store %arg18[%c0_38, %c0_39], %91 {strides = array<i32>} : memref<4x128xf32, #tpu.memory_space<vmem>>, vector<4x128xf32>,
    return
  }
  func.func @transform_0(%arg0: i32) -> (i32, i32) {
    %c0_i32 = arith.constant 0 : i32
    %c0_i32_0 = arith.constant 0 : i32
    return %c0_i32, %arg0 : i32, i32
  }
  func.func @transform_1(%arg0: i32) -> (i32, i32) {
    %c0_i32 = arith.constant 0 : i32
    %c0_i32_0 = arith.constant 0 : i32
    %c0_i32_1 = arith.constant 0 : i32
    return %c0_i32, %c0_i32_0 : i32, i32
  }
  func.func @transform_2(%arg0: i32) -> (i32, i32) {
    %c0_i32 = arith.constant 0 : i32
    %c0_i32_0 = arith.constant 0 : i32
    %c0_i32_1 = arith.constant 0 : i32
    return %c0_i32, %c0_i32_0 : i32, i32
  }
  func.func @transform_3(%arg0: i32) -> (i32, i32) {
    %c0_i32 = arith.constant 0 : i32
    %c0_i32_0 = arith.constant 0 : i32
    %c0_i32_1 = arith.constant 0 : i32
    return %c0_i32, %c0_i32_0 : i32, i32
  }
  func.func @transform_4(%arg0: i32) -> (i32, i32) {
    %c0_i32 = arith.constant 0 : i32
    %c0_i32_0 = arith.constant 0 : i32
    %c0_i32_1 = arith.constant 0 : i32
    return %c0_i32, %c0_i32_0 : i32, i32
  }
  func.func @transform_5(%arg0: i32) -> (i32, i32) {
    %c0_i32 = arith.constant 0 : i32
    %c0_i32_0 = arith.constant 0 : i32
    %c0_i32_1 = arith.constant 0 : i32
    return %c0_i32, %c0_i32_0 : i32, i32
  }
  func.func @transform_6(%arg0: i32) -> (i32, i32) {
    %c0_i32 = arith.constant 0 : i32
    %c0_i32_0 = arith.constant 0 : i32
    %c0_i32_1 = arith.constant 0 : i32
    return %c0_i32, %c0_i32_0 : i32, i32
  }
  func.func @transform_7(%arg0: i32) -> (i32, i32) {
    %c0_i32 = arith.constant 0 : i32
    %c0_i32_0 = arith.constant 0 : i32
    %c0_i32_1 = arith.constant 0 : i32
    return %c0_i32, %c0_i32_0 : i32, i32
  }
  func.func @transform_8(%arg0: i32) -> (i32, i32) {
    %c0_i32 = arith.constant 0 : i32
    %c0_i32_0 = arith.constant 0 : i32
    %c0_i32_1 = arith.constant 0 : i32
    return %c0_i32, %c0_i32_0 : i32, i32
  }
  func.func @transform_9(%arg0: i32) -> (i32, i32) {
    %c0_i32 = arith.constant 0 : i32
    %c0_i32_0 = arith.constant 0 : i32
    %c0_i32_1 = arith.constant 0 : i32
    return %c0_i32, %c0_i32_0 : i32, i32
  }
  func.func @transform_10(%arg0: i32) -> (i32, i32) {
    %c0_i32 = arith.constant 0 : i32
    %c0_i32_0 = arith.constant 0 : i32
    %c0_i32_1 = arith.constant 0 : i32
    return %c0_i32, %c0_i32_0 : i32, i32
  }
  func.func @transform_11(%arg0: i32) -> (i32, i32) {
    %c0_i32 = arith.constant 0 : i32
    %c0_i32_0 = arith.constant 0 : i32
    %c0_i32_1 = arith.constant 0 : i32
    return %c0_i32, %c0_i32_0 : i32, i32
  }
  func.func @transform_12(%arg0: i32) -> (i32, i32) {
    %c0_i32 = arith.constant 0 : i32
    %c0_i32_0 = arith.constant 0 : i32
    %c0_i32_1 = arith.constant 0 : i32
    return %c0_i32, %c0_i32_0 : i32, i32
  }
  func.func @transform_13(%arg0: i32) -> (i32, i32) {
    %c0_i32 = arith.constant 0 : i32
    %c0_i32_0 = arith.constant 0 : i32
    %c0_i32_1 = arith.constant 0 : i32
    return %c0_i32, %c0_i32_0 : i32, i32
  }
  func.func @transform_14(%arg0: i32) -> (i32, i32) {
    %c0_i32 = arith.constant 0 : i32
    %c0_i32_0 = arith.constant 0 : i32
    %c0_i32_1 = arith.constant 0 : i32
    return %c0_i32, %c0_i32_0 : i32, i32
  }
  func.func @transform_15(%arg0: i32) -> (i32, i32) {
    %c0_i32 = arith.constant 0 : i32
    %c0_i32_0 = arith.constant 0 : i32
    %c0_i32_1 = arith.constant 0 : i32
    return %c0_i32, %c0_i32_0 : i32, i32
  }
  func.func @transform_16(%arg0: i32) -> (i32, i32) {
    %c0_i32 = arith.constant 0 : i32
    %c0_i32_0 = arith.constant 0 : i32
    %c0_i32_1 = arith.constant 0 : i32
    return %c0_i32, %c0_i32_0 : i32, i32
  }
  func.func @transform_17(%arg0: i32) -> (i32, i32) {
    %c0_i32 = arith.constant 0 : i32
    %c0_i32_0 = arith.constant 0 : i32
    return %c0_i32, %arg0 : i32, i32
  }
}

</mosaic_0001>

<llo_original>
// kernel: ae_3d_200_forward.1
$region0: #{ae_3d_200_forward.1}
  #allocation0 [shape = 'u32[]', space=smem, size = 0x4, offset = 0x4, fixed_abs, tag = 'smem constant byte address 0x4 - core index']
  #allocation1 [shape = 'u32[144,128]{1,0:T(1,128)}', space=vmem, size = 0x12000, scoped, tag = 'internal scratch']
  %s0 = inlined_call_operand.vmem [shape: f32[4,128], index: 0, kind: input, shape index: {}]
  %s1 = inlined_call_operand.vmem [shape: f32[200,4], index: 1, kind: input, shape index: {}]
  %s2 = inlined_call_operand.vmem [shape: f32[200,1], index: 2, kind: input, shape index: {}]
  %s3 = inlined_call_operand.vmem [shape: bf16[100,200], index: 3, kind: input, shape index: {}]
  %s4 = inlined_call_operand.vmem [shape: f32[100,1], index: 4, kind: input, shape index: {}]
  %s5 = inlined_call_operand.vmem [shape: bf16[50,100], index: 5, kind: input, shape index: {}]
  %s6 = inlined_call_operand.vmem [shape: f32[50,1], index: 6, kind: input, shape index: {}]
  %s7 = inlined_call_operand.vmem [shape: bf16[3,50], index: 7, kind: input, shape index: {}]
  %s8 = inlined_call_operand.vmem [shape: f32[3,1], index: 8, kind: input, shape index: {}]
  %s9 = inlined_call_operand.vmem [shape: f32[50,3], index: 9, kind: input, shape index: {}]
  %s10 = inlined_call_operand.vmem [shape: f32[50,1], index: 10, kind: input, shape index: {}]
  %s11 = inlined_call_operand.vmem [shape: bf16[100,50], index: 11, kind: input, shape index: {}]
  %s12 = inlined_call_operand.vmem [shape: f32[100,1], index: 12, kind: input, shape index: {}]
  %s13 = inlined_call_operand.vmem [shape: bf16[200,100], index: 13, kind: input, shape index: {}]
  %s14 = inlined_call_operand.vmem [shape: f32[200,1], index: 14, kind: input, shape index: {}]
  %s15 = inlined_call_operand.vmem [shape: bf16[4,200], index: 15, kind: input, shape index: {}]
  %s16 = inlined_call_operand.vmem [shape: f32[4,1], index: 16, kind: input, shape index: {}]
  %s17 = inlined_call_operand.vmem [shape: f32[4,128], index: 17, kind: output, shape index: {}]
  %s18 = sld [smem:[#allocation0]]
  $region78: #{ae_3d_200_forward.1} parent=0
    _
  %s20 = ssub.s32 1, %s18
  %s21 = scalar_select 0, %s20, %s18
  // Predicated region
  $region2: #{ae_3d_200_forward.1} parent=0 // pred_check
    _
  $region3: #{ae_3d_200_forward.1} parent=0 // pred_check_branch
    %23 = sbr.rel (0) target = $region5
  $region4: #{ae_3d_200_forward.1} parent=0 // pred_region
    _
  $region5: #{ae_3d_200_forward.1} parent=0 // pred_fallthru
    _
  // Predicated region
  $region6: #{ae_3d_200_forward.1} parent=0 // pred_check
    _
  $region7: #{ae_3d_200_forward.1} parent=0 // pred_check_branch
    %25 = sbr.rel (0) target = $region9
  $region8: #{ae_3d_200_forward.1} parent=0 // pred_region
    _
  $region9: #{ae_3d_200_forward.1} parent=0 // pred_fallthru
    _
  // Predicated region
  $region10: #{ae_3d_200_forward.1} parent=0 // pred_check
    _
  $region11: #{ae_3d_200_forward.1} parent=0 // pred_check_branch
    %27 = sbr.rel (0) target = $region13
  $region12: #{ae_3d_200_forward.1} parent=0 // pred_region
    _
  $region13: #{ae_3d_200_forward.1} parent=0 // pred_fallthru
    _
  // Predicated region
  $region14: #{ae_3d_200_forward.1} parent=0 // pred_check
    _
  $region15: #{ae_3d_200_forward.1} parent=0 // pred_check_branch
    %29 = sbr.rel (0) target = $region17
  $region16: #{ae_3d_200_forward.1} parent=0 // pred_region
    _
  $region17: #{ae_3d_200_forward.1} parent=0 // pred_fallthru
    _
  // Predicated region
  $region18: #{ae_3d_200_forward.1} parent=0 // pred_check
    _
  $region19: #{ae_3d_200_forward.1} parent=0 // pred_check_branch
    %31 = sbr.rel (0) target = $region21
  $region20: #{ae_3d_200_forward.1} parent=0 // pred_region
    _
  $region21: #{ae_3d_200_forward.1} parent=0 // pred_fallthru
    _
  // Predicated region
  $region22: #{ae_3d_200_forward.1} parent=0 // pred_check
    _
  $region23: #{ae_3d_200_forward.1} parent=0 // pred_check_branch
    %33 = sbr.rel (0) target = $region25
  $region24: #{ae_3d_200_forward.1} parent=0 // pred_region
    _
  $region25: #{ae_3d_200_forward.1} parent=0 // pred_fallthru
    _
  // Predicated region
  $region26: #{ae_3d_200_forward.1} parent=0 // pred_check
    _
  $region27: #{ae_3d_200_forward.1} parent=0 // pred_check_branch
    %35 = sbr.rel (0) target = $region29
  $region28: #{ae_3d_200_forward.1} parent=0 // pred_region
    _
  $region29: #{ae_3d_200_forward.1} parent=0 // pred_fallthru
    _
  // Predicated region
  $region30: #{ae_3d_200_forward.1} parent=0 // pred_check
    _
  $region31: #{ae_3d_200_forward.1} parent=0 // pred_check_branch
    %37 = sbr.rel (0) target = $region33
  $region32: #{ae_3d_200_forward.1} parent=0 // pred_region
    _
  $region33: #{ae_3d_200_forward.1} parent=0 // pred_fallthru
    _
  // Predicated region
  $region34: #{ae_3d_200_forward.1} parent=0 // pred_check
    _
  $region35: #{ae_3d_200_forward.1} parent=0 // pred_check_branch
    %39 = sbr.rel (0) target = $region37
  $region36: #{ae_3d_200_forward.1} parent=0 // pred_region
    _
  $region37: #{ae_3d_200_forward.1} parent=0 // pred_fallthru
    _
  // Predicated region
  $region38: #{ae_3d_200_forward.1} parent=0 // pred_check
    _
  $region39: #{ae_3d_200_forward.1} parent=0 // pred_check_branch
    %41 = sbr.rel (0) target = $region41
  $region40: #{ae_3d_200_forward.1} parent=0 // pred_region
    _
  $region41: #{ae_3d_200_forward.1} parent=0 // pred_fallthru
    _
  // Predicated region
  $region42: #{ae_3d_200_forward.1} parent=0 // pred_check
    _
  $region43: #{ae_3d_200_forward.1} parent=0 // pred_check_branch
    %43 = sbr.rel (0) target = $region45
  $region44: #{ae_3d_200_forward.1} parent=0 // pred_region
    _
  $region45: #{ae_3d_200_forward.1} parent=0 // pred_fallthru
    _
  // Predicated region
  $region46: #{ae_3d_200_forward.1} parent=0 // pred_check
    _
  $region47: #{ae_3d_200_forward.1} parent=0 // pred_check_branch
    %45 = sbr.rel (0) target = $region49
  $region48: #{ae_3d_200_forward.1} parent=0 // pred_region
    _
  $region49: #{ae_3d_200_forward.1} parent=0 // pred_fallthru
    _
  // Predicated region
  $region50: #{ae_3d_200_forward.1} parent=0 // pred_check
    _
  $region51: #{ae_3d_200_forward.1} parent=0 // pred_check_branch
    %47 = sbr.rel (0) target = $region53
  $region52: #{ae_3d_200_forward.1} parent=0 // pred_region
    _
  $region53: #{ae_3d_200_forward.1} parent=0 // pred_fallthru
    _
  // Predicated region
  $region54: #{ae_3d_200_forward.1} parent=0 // pred_check
    _
  $region55: #{ae_3d_200_forward.1} parent=0 // pred_check_branch
    %49 = sbr.rel (0) target = $region57
  $region56: #{ae_3d_200_forward.1} parent=0 // pred_region
    _
  $region57: #{ae_3d_200_forward.1} parent=0 // pred_fallthru
    _
  // Predicated region
  $region58: #{ae_3d_200_forward.1} parent=0 // pred_check
    _
  $region59: #{ae_3d_200_forward.1} parent=0 // pred_check_branch
    %51 = sbr.rel (0) target = $region61
  $region60: #{ae_3d_200_forward.1} parent=0 // pred_region
    _
  $region61: #{ae_3d_200_forward.1} parent=0 // pred_fallthru
    _
  // Predicated region
  $region62: #{ae_3d_200_forward.1} parent=0 // pred_check
    _
  $region63: #{ae_3d_200_forward.1} parent=0 // pred_check_branch
    %53 = sbr.rel (0) target = $region65
  $region64: #{ae_3d_200_forward.1} parent=0 // pred_region
    _
  $region65: #{ae_3d_200_forward.1} parent=0 // pred_fallthru
    _
  // Predicated region
  $region66: #{ae_3d_200_forward.1} parent=0 // pred_check
    _
  $region67: #{ae_3d_200_forward.1} parent=0 // pred_check_branch
    %55 = sbr.rel (0) target = $region69
  $region68: #{ae_3d_200_forward.1} parent=0 // pred_region
    _
  $region69: #{ae_3d_200_forward.1} parent=0 // pred_fallthru
    _
  %v57 = vld [vmem:[%s0] sm:$0xf]
  %v58 = vld [vmem:[%s1] sm:$0xff]
  %v59 = vld [vmem:[%s1 + $0x8] sm:$0xff]
  %v60 = vld [vmem:[%s1 + $0x10] sm:$0xff]
  %v61 = vld [vmem:[%s1 + $0x18] sm:$0xff]
  %v62 = vld [vmem:[%s1 + $0x20] sm:$0xff]
  %v63 = vld [vmem:[%s1 + $0x28] sm:$0xff]
  %v64 = vld [vmem:[%s1 + $0x30] sm:$0xff]
  %v65 = vld [vmem:[%s1 + $0x38] sm:$0xff]
  %v66 = vld [vmem:[%s1 + $0x40] sm:$0xff]
  %v67 = vld [vmem:[%s1 + $0x48] sm:$0xff]
  %v68 = vld [vmem:[%s1 + $0x50] sm:$0xff]
  %v69 = vld [vmem:[%s1 + $0x58] sm:$0xff]
  %v70 = vld [vmem:[%s1 + $0x60] sm:$0xff]
  %v71 = vld [vmem:[%s1 + $0x68] sm:$0xff]
  %v72 = vld [vmem:[%s1 + $0x70] sm:$0xff]
  %v73 = vld [vmem:[%s1 + $0x78] sm:$0xff]
  %v74 = vld [vmem:[%s1 + $0x80] sm:$0xff]
  %v75 = vld [vmem:[%s1 + $0x88] sm:$0xff]
  %v76 = vld [vmem:[%s1 + $0x90] sm:$0xff]
  %v77 = vld [vmem:[%s1 + $0x98] sm:$0xff]
  %v78 = vld [vmem:[%s1 + $0xa0] sm:$0xff]
  %v79 = vld [vmem:[%s1 + $0xa8] sm:$0xff]
  %v80 = vld [vmem:[%s1 + $0xb0] sm:$0xff]
  %v81 = vld [vmem:[%s1 + $0xb8] sm:$0xff]
  %v82 = vld [vmem:[%s1 + $0xc0] sm:$0xff]
  %v83 = vld [vmem:[%s2] sm:$0xff]
  %v84 = vld [vmem:[%s2 + $0x8] sm:$0xff]
  %v85 = vld [vmem:[%s2 + $0x10] sm:$0xff]
  %v86 = vld [vmem:[%s2 + $0x18] sm:$0xff]
  %v87 = vld [vmem:[%s2 + $0x20] sm:$0xff]
  %v88 = vld [vmem:[%s2 + $0x28] sm:$0xff]
  %v89 = vld [vmem:[%s2 + $0x30] sm:$0xff]
  %v90 = vld [vmem:[%s2 + $0x38] sm:$0xff]
  %v91 = vld [vmem:[%s2 + $0x40] sm:$0xff]
  %v92 = vld [vmem:[%s2 + $0x48] sm:$0xff]
  %v93 = vld [vmem:[%s2 + $0x50] sm:$0xff]
  %v94 = vld [vmem:[%s2 + $0x58] sm:$0xff]
  %v95 = vld [vmem:[%s2 + $0x60] sm:$0xff]
  %v96 = vld [vmem:[%s2 + $0x68] sm:$0xff]
  %v97 = vld [vmem:[%s2 + $0x70] sm:$0xff]
  %v98 = vld [vmem:[%s2 + $0x78] sm:$0xff]
  %v99 = vld [vmem:[%s2 + $0x80] sm:$0xff]
  %v100 = vld [vmem:[%s2 + $0x88] sm:$0xff]
  %v101 = vld [vmem:[%s2 + $0x90] sm:$0xff]
  %v102 = vld [vmem:[%s2 + $0x98] sm:$0xff]
  %v103 = vld [vmem:[%s2 + $0xa0] sm:$0xff]
  %v104 = vld [vmem:[%s2 + $0xa8] sm:$0xff]
  %v105 = vld [vmem:[%s2 + $0xb0] sm:$0xff]
  %v106 = vld [vmem:[%s2 + $0xb8] sm:$0xff]
  %v107 = vld [vmem:[%s2 + $0xc0] sm:$0xff]
  %109 = vset.pattern.permute.xlu0 0
  %110 = vperm.xlu0 %109, %v58
  %v111 = vpop.permute.xlu0 %110
  %114 = vset.pattern.permute.xlu0 0
  %115 = vperm.xlu0 %114, %v59
  %v116 = vpop.permute.xlu0 %115
  %119 = vset.pattern.permute.xlu0 0
  %120 = vperm.xlu0 %119, %v60
  %v121 = vpop.permute.xlu0 %120
  %124 = vset.pattern.permute.xlu0 0
  %125 = vperm.xlu0 %124, %v61
  %v126 = vpop.permute.xlu0 %125
  %129 = vset.pattern.permute.xlu0 0
  %130 = vperm.xlu0 %129, %v62
  %v131 = vpop.permute.xlu0 %130
  %134 = vset.pattern.permute.xlu0 0
  %135 = vperm.xlu0 %134, %v63
  %v136 = vpop.permute.xlu0 %135
  %139 = vset.pattern.permute.xlu0 0
  %140 = vperm.xlu0 %139, %v64
  %v141 = vpop.permute.xlu0 %140
  %144 = vset.pattern.permute.xlu0 0
  %145 = vperm.xlu0 %144, %v65
  %v146 = vpop.permute.xlu0 %145
  %149 = vset.pattern.permute.xlu0 0
  %150 = vperm.xlu0 %149, %v66
  %v151 = vpop.permute.xlu0 %150
  %154 = vset.pattern.permute.xlu0 0
  %155 = vperm.xlu0 %154, %v67
  %v156 = vpop.permute.xlu0 %155
  %159 = vset.pattern.permute.xlu0 0
  %160 = vperm.xlu0 %159, %v68
  %v161 = vpop.permute.xlu0 %160
  %164 = vset.pattern.permute.xlu0 0
  %165 = vperm.xlu0 %164, %v69
  %v166 = vpop.permute.xlu0 %165
  %169 = vset.pattern.permute.xlu0 0
  %170 = vperm.xlu0 %169, %v70
  %v171 = vpop.permute.xlu0 %170
  %174 = vset.pattern.permute.xlu0 0
  %175 = vperm.xlu0 %174, %v71
  %v176 = vpop.permute.xlu0 %175
  %179 = vset.pattern.permute.xlu0 0
  %180 = vperm.xlu0 %179, %v72
  %v181 = vpop.permute.xlu0 %180
  %184 = vset.pattern.permute.xlu0 0
  %185 = vperm.xlu0 %184, %v73
  %v186 = vpop.permute.xlu0 %185
  %189 = vset.pattern.permute.xlu0 0
  %190 = vperm.xlu0 %189, %v74
  %v191 = vpop.permute.xlu0 %190
  %194 = vset.pattern.permute.xlu0 0
  %195 = vperm.xlu0 %194, %v75
  %v196 = vpop.permute.xlu0 %195
  %199 = vset.pattern.permute.xlu0 0
  %200 = vperm.xlu0 %199, %v76
  %v201 = vpop.permute.xlu0 %200
  %204 = vset.pattern.permute.xlu0 0
  %205 = vperm.xlu0 %204, %v77
  %v206 = vpop.permute.xlu0 %205
  %209 = vset.pattern.permute.xlu0 0
  %210 = vperm.xlu0 %209, %v78
  %v211 = vpop.permute.xlu0 %210
  %214 = vset.pattern.permute.xlu0 0
  %215 = vperm.xlu0 %214, %v79
  %v216 = vpop.permute.xlu0 %215
  %219 = vset.pattern.permute.xlu0 0
  %220 = vperm.xlu0 %219, %v80
  %v221 = vpop.permute.xlu0 %220
  %224 = vset.pattern.permute.xlu0 0
  %225 = vperm.xlu0 %224, %v81
  %v226 = vpop.permute.xlu0 %225
  %229 = vset.pattern.permute.xlu0 0
  %230 = vperm.xlu0 %229, %v82
  %v231 = vpop.permute.xlu0 %230
  %v233 = vlaneseq
  %v234 = vshrl.u32 %v233, 7
  %v235 = vsub.s32 0, %v234
  %v236 = vrot.slane %v57, %v235
  %v237 = vmul.f32 %v111, %v236
  %v238 = vmul.f32 %v116, %v236
  %v239 = vmul.f32 %v121, %v236
  %v240 = vmul.f32 %v126, %v236
  %v241 = vmul.f32 %v131, %v236
  %v242 = vmul.f32 %v136, %v236
  %v243 = vmul.f32 %v141, %v236
  %v244 = vmul.f32 %v146, %v236
  %v245 = vmul.f32 %v151, %v236
  %v246 = vmul.f32 %v156, %v236
  %v247 = vmul.f32 %v161, %v236
  %v248 = vmul.f32 %v166, %v236
  %v249 = vmul.f32 %v171, %v236
  %v250 = vmul.f32 %v176, %v236
  %v251 = vmul.f32 %v181, %v236
  %v252 = vmul.f32 %v186, %v236
  %v253 = vmul.f32 %v191, %v236
  %v254 = vmul.f32 %v196, %v236
  %v255 = vmul.f32 %v201, %v236
  %v256 = vmul.f32 %v206, %v236
  %v257 = vmul.f32 %v211, %v236
  %v258 = vmul.f32 %v216, %v236
  %v259 = vmul.f32 %v221, %v236
  %v260 = vmul.f32 %v226, %v236
  %v261 = vmul.f32 %v231, %v236
  %262 = vset.pattern.permute.xlu0 1
  %263 = vperm.xlu0 %262, %v58
  %v264 = vpop.permute.xlu0 %263
  %266 = vset.pattern.permute.xlu0 1
  %267 = vperm.xlu0 %266, %v59
  %v268 = vpop.permute.xlu0 %267
  %270 = vset.pattern.permute.xlu0 1
  %271 = vperm.xlu0 %270, %v60
  %v272 = vpop.permute.xlu0 %271
  %274 = vset.pattern.permute.xlu0 1
  %275 = vperm.xlu0 %274, %v61
  %v276 = vpop.permute.xlu0 %275
  %278 = vset.pattern.permute.xlu0 1
  %279 = vperm.xlu0 %278, %v62
  %v280 = vpop.permute.xlu0 %279
  %282 = vset.pattern.permute.xlu0 1
  %283 = vperm.xlu0 %282, %v63
  %v284 = vpop.permute.xlu0 %283
  %286 = vset.pattern.permute.xlu0 1
  %287 = vperm.xlu0 %286, %v64
  %v288 = vpop.permute.xlu0 %287
  %290 = vset.pattern.permute.xlu0 1
  %291 = vperm.xlu0 %290, %v65
  %v292 = vpop.permute.xlu0 %291
  %294 = vset.pattern.permute.xlu0 1
  %295 = vperm.xlu0 %294, %v66
  %v296 = vpop.permute.xlu0 %295
  %298 = vset.pattern.permute.xlu0 1
  %299 = vperm.xlu0 %298, %v67
  %v300 = vpop.permute.xlu0 %299
  %302 = vset.pattern.permute.xlu0 1
  %303 = vperm.xlu0 %302, %v68
  %v304 = vpop.permute.xlu0 %303
  %306 = vset.pattern.permute.xlu0 1
  %307 = vperm.xlu0 %306, %v69
  %v308 = vpop.permute.xlu0 %307
  %310 = vset.pattern.permute.xlu0 1
  %311 = vperm.xlu0 %310, %v70
  %v312 = vpop.permute.xlu0 %311
  %314 = vset.pattern.permute.xlu0 1
  %315 = vperm.xlu0 %314, %v71
  %v316 = vpop.permute.xlu0 %315
  %318 = vset.pattern.permute.xlu0 1
  %319 = vperm.xlu0 %318, %v72
  %v320 = vpop.permute.xlu0 %319
  %322 = vset.pattern.permute.xlu0 1
  %323 = vperm.xlu0 %322, %v73
  %v324 = vpop.permute.xlu0 %323
  %326 = vset.pattern.permute.xlu0 1
  %327 = vperm.xlu0 %326, %v74
  %v328 = vpop.permute.xlu0 %327
  %330 = vset.pattern.permute.xlu0 1
  %331 = vperm.xlu0 %330, %v75
  %v332 = vpop.permute.xlu0 %331
  %334 = vset.pattern.permute.xlu0 1
  %335 = vperm.xlu0 %334, %v76
  %v336 = vpop.permute.xlu0 %335
  %338 = vset.pattern.permute.xlu0 1
  %339 = vperm.xlu0 %338, %v77
  %v340 = vpop.permute.xlu0 %339
  %342 = vset.pattern.permute.xlu0 1
  %343 = vperm.xlu0 %342, %v78
  %v344 = vpop.permute.xlu0 %343
  %346 = vset.pattern.permute.xlu0 1
  %347 = vperm.xlu0 %346, %v79
  %v348 = vpop.permute.xlu0 %347
  %350 = vset.pattern.permute.xlu0 1
  %351 = vperm.xlu0 %350, %v80
  %v352 = vpop.permute.xlu0 %351
  %354 = vset.pattern.permute.xlu0 1
  %355 = vperm.xlu0 %354, %v81
  %v356 = vpop.permute.xlu0 %355
  %358 = vset.pattern.permute.xlu0 1
  %359 = vperm.xlu0 %358, %v82
  %v360 = vpop.permute.xlu0 %359
  %v362 = vlaneseq
  %v363 = vshrl.u32 %v362, 7
  %v364 = vsub.s32 1, %v363
  %v365 = vrot.slane %v57, %v364
  %v366 = vmul.f32 %v264, %v365
  %v367 = vmul.f32 %v268, %v365
  %v368 = vmul.f32 %v272, %v365
  %v369 = vmul.f32 %v276, %v365
  %v370 = vmul.f32 %v280, %v365
  %v371 = vmul.f32 %v284, %v365
  %v372 = vmul.f32 %v288, %v365
  %v373 = vmul.f32 %v292, %v365
  %v374 = vmul.f32 %v296, %v365
  %v375 = vmul.f32 %v300, %v365
  %v376 = vmul.f32 %v304, %v365
  %v377 = vmul.f32 %v308, %v365
  %v378 = vmul.f32 %v312, %v365
  %v379 = vmul.f32 %v316, %v365
  %v380 = vmul.f32 %v320, %v365
  %v381 = vmul.f32 %v324, %v365
  %v382 = vmul.f32 %v328, %v365
  %v383 = vmul.f32 %v332, %v365
  %v384 = vmul.f32 %v336, %v365
  %v385 = vmul.f32 %v340, %v365
  %v386 = vmul.f32 %v344, %v365
  %v387 = vmul.f32 %v348, %v365
  %v388 = vmul.f32 %v352, %v365
  %v389 = vmul.f32 %v356, %v365
  %v390 = vmul.f32 %v360, %v365
  %v391 = vadd.f32 %v237, %v366
  %v392 = vadd.f32 %v238, %v367
  %v393 = vadd.f32 %v239, %v368
  %v394 = vadd.f32 %v240, %v369
  %v395 = vadd.f32 %v241, %v370
  %v396 = vadd.f32 %v242, %v371
  %v397 = vadd.f32 %v243, %v372
  %v398 = vadd.f32 %v244, %v373
  %v399 = vadd.f32 %v245, %v374
  %v400 = vadd.f32 %v246, %v375
  %v401 = vadd.f32 %v247, %v376
  %v402 = vadd.f32 %v248, %v377
  %v403 = vadd.f32 %v249, %v378
  %v404 = vadd.f32 %v250, %v379
  %v405 = vadd.f32 %v251, %v380
  %v406 = vadd.f32 %v252, %v381
  %v407 = vadd.f32 %v253, %v382
  %v408 = vadd.f32 %v254, %v383
  %v409 = vadd.f32 %v255, %v384
  %v410 = vadd.f32 %v256, %v385
  %v411 = vadd.f32 %v257, %v386
  %v412 = vadd.f32 %v258, %v387
  %v413 = vadd.f32 %v259, %v388
  %v414 = vadd.f32 %v260, %v389
  %v415 = vadd.f32 %v261, %v390
  %416 = vset.pattern.permute.xlu0 2
  %417 = vperm.xlu0 %416, %v58
  %v418 = vpop.permute.xlu0 %417
  %420 = vset.pattern.permute.xlu0 2
  %421 = vperm.xlu0 %420, %v59
  %v422 = vpop.permute.xlu0 %421
  %424 = vset.pattern.permute.xlu0 2
  %425 = vperm.xlu0 %424, %v60
  %v426 = vpop.permute.xlu0 %425
  %428 = vset.pattern.permute.xlu0 2
  %429 = vperm.xlu0 %428, %v61
  %v430 = vpop.permute.xlu0 %429
  %432 = vset.pattern.permute.xlu0 2
  %433 = vperm.xlu0 %432, %v62
  %v434 = vpop.permute.xlu0 %433
  %436 = vset.pattern.permute.xlu0 2
  %437 = vperm.xlu0 %436, %v63
  %v438 = vpop.permute.xlu0 %437
  %440 = vset.pattern.permute.xlu0 2
  %441 = vperm.xlu0 %440, %v64
  %v442 = vpop.permute.xlu0 %441
  %444 = vset.pattern.permute.xlu0 2
  %445 = vperm.xlu0 %444, %v65
  %v446 = vpop.permute.xlu0 %445
  %448 = vset.pattern.permute.xlu0 2
  %449 = vperm.xlu0 %448, %v66
  %v450 = vpop.permute.xlu0 %449
  %452 = vset.pattern.permute.xlu0 2
  %453 = vperm.xlu0 %452, %v67
  %v454 = vpop.permute.xlu0 %453
  %456 = vset.pattern.permute.xlu0 2
  %457 = vperm.xlu0 %456, %v68
  %v458 = vpop.permute.xlu0 %457
  %460 = vset.pattern.permute.xlu0 2
  %461 = vperm.xlu0 %460, %v69
  %v462 = vpop.permute.xlu0 %461
  %464 = vset.pattern.permute.xlu0 2
  %465 = vperm.xlu0 %464, %v70
  %v466 = vpop.permute.xlu0 %465
  %468 = vset.pattern.permute.xlu0 2
  %469 = vperm.xlu0 %468, %v71
  %v470 = vpop.permute.xlu0 %469
  %472 = vset.pattern.permute.xlu0 2
  %473 = vperm.xlu0 %472, %v72
  %v474 = vpop.permute.xlu0 %473
  %476 = vset.pattern.permute.xlu0 2
  %477 = vperm.xlu0 %476, %v73
  %v478 = vpop.permute.xlu0 %477
  %480 = vset.pattern.permute.xlu0 2
  %481 = vperm.xlu0 %480, %v74
  %v482 = vpop.permute.xlu0 %481
  %484 = vset.pattern.permute.xlu0 2
  %485 = vperm.xlu0 %484, %v75
  %v486 = vpop.permute.xlu0 %485
  %488 = vset.pattern.permute.xlu0 2
  %489 = vperm.xlu0 %488, %v76
  %v490 = vpop.permute.xlu0 %489
  %492 = vset.pattern.permute.xlu0 2
  %493 = vperm.xlu0 %492, %v77
  %v494 = vpop.permute.xlu0 %493
  %496 = vset.pattern.permute.xlu0 2
  %497 = vperm.xlu0 %496, %v78
  %v498 = vpop.permute.xlu0 %497
  %500 = vset.pattern.permute.xlu0 2
  %501 = vperm.xlu0 %500, %v79
  %v502 = vpop.permute.xlu0 %501
  %504 = vset.pattern.permute.xlu0 2
  %505 = vperm.xlu0 %504, %v80
  %v506 = vpop.permute.xlu0 %505
  %508 = vset.pattern.permute.xlu0 2
  %509 = vperm.xlu0 %508, %v81
  %v510 = vpop.permute.xlu0 %509
  %512 = vset.pattern.permute.xlu0 2
  %513 = vperm.xlu0 %512, %v82
  %v514 = vpop.permute.xlu0 %513
  %v516 = vlaneseq
  %v517 = vshrl.u32 %v516, 7
  %v518 = vsub.s32 2, %v517
  %v519 = vrot.slane %v57, %v518
  %v520 = vmul.f32 %v418, %v519
  %v521 = vmul.f32 %v422, %v519
  %v522 = vmul.f32 %v426, %v519
  %v523 = vmul.f32 %v430, %v519
  %v524 = vmul.f32 %v434, %v519
  %v525 = vmul.f32 %v438, %v519
  %v526 = vmul.f32 %v442, %v519
  %v527 = vmul.f32 %v446, %v519
  %v528 = vmul.f32 %v450, %v519
  %v529 = vmul.f32 %v454, %v519
  %v530 = vmul.f32 %v458, %v519
  %v531 = vmul.f32 %v462, %v519
  %v532 = vmul.f32 %v466, %v519
  %v533 = vmul.f32 %v470, %v519
  %v534 = vmul.f32 %v474, %v519
  %v535 = vmul.f32 %v478, %v519
  %v536 = vmul.f32 %v482, %v519
  %v537 = vmul.f32 %v486, %v519
  %v538 = vmul.f32 %v490, %v519
  %v539 = vmul.f32 %v494, %v519
  %v540 = vmul.f32 %v498, %v519
  %v541 = vmul.f32 %v502, %v519
  %v542 = vmul.f32 %v506, %v519
  %v543 = vmul.f32 %v510, %v519
  %v544 = vmul.f32 %v514, %v519
  %v545 = vadd.f32 %v391, %v520
  %v546 = vadd.f32 %v392, %v521
  %v547 = vadd.f32 %v393, %v522
  %v548 = vadd.f32 %v394, %v523
  %v549 = vadd.f32 %v395, %v524
  %v550 = vadd.f32 %v396, %v525
  %v551 = vadd.f32 %v397, %v526
  %v552 = vadd.f32 %v398, %v527
  %v553 = vadd.f32 %v399, %v528
  %v554 = vadd.f32 %v400, %v529
  %v555 = vadd.f32 %v401, %v530
  %v556 = vadd.f32 %v402, %v531
  %v557 = vadd.f32 %v403, %v532
  %v558 = vadd.f32 %v404, %v533
  %v559 = vadd.f32 %v405, %v534
  %v560 = vadd.f32 %v406, %v535
  %v561 = vadd.f32 %v407, %v536
  %v562 = vadd.f32 %v408, %v537
  %v563 = vadd.f32 %v409, %v538
  %v564 = vadd.f32 %v410, %v539
  %v565 = vadd.f32 %v411, %v540
  %v566 = vadd.f32 %v412, %v541
  %v567 = vadd.f32 %v413, %v542
  %v568 = vadd.f32 %v414, %v543
  %v569 = vadd.f32 %v415, %v544
  %570 = vset.pattern.permute.xlu0 3
  %571 = vperm.xlu0 %570, %v58
  %v572 = vpop.permute.xlu0 %571
  %574 = vset.pattern.permute.xlu0 3
  %575 = vperm.xlu0 %574, %v59
  %v576 = vpop.permute.xlu0 %575
  %578 = vset.pattern.permute.xlu0 3
  %579 = vperm.xlu0 %578, %v60
  %v580 = vpop.permute.xlu0 %579
  %582 = vset.pattern.permute.xlu0 3
  %583 = vperm.xlu0 %582, %v61
  %v584 = vpop.permute.xlu0 %583
  %586 = vset.pattern.permute.xlu0 3
  %587 = vperm.xlu0 %586, %v62
  %v588 = vpop.permute.xlu0 %587
  %590 = vset.pattern.permute.xlu0 3
  %591 = vperm.xlu0 %590, %v63
  %v592 = vpop.permute.xlu0 %591
  %594 = vset.pattern.permute.xlu0 3
  %595 = vperm.xlu0 %594, %v64
  %v596 = vpop.permute.xlu0 %595
  %598 = vset.pattern.permute.xlu0 3
  %599 = vperm.xlu0 %598, %v65
  %v600 = vpop.permute.xlu0 %599
  %602 = vset.pattern.permute.xlu0 3
  %603 = vperm.xlu0 %602, %v66
  %v604 = vpop.permute.xlu0 %603
  %606 = vset.pattern.permute.xlu0 3
  %607 = vperm.xlu0 %606, %v67
  %v608 = vpop.permute.xlu0 %607
  %610 = vset.pattern.permute.xlu0 3
  %611 = vperm.xlu0 %610, %v68
  %v612 = vpop.permute.xlu0 %611
  %614 = vset.pattern.permute.xlu0 3
  %615 = vperm.xlu0 %614, %v69
  %v616 = vpop.permute.xlu0 %615
  %618 = vset.pattern.permute.xlu0 3
  %619 = vperm.xlu0 %618, %v70
  %v620 = vpop.permute.xlu0 %619
  %622 = vset.pattern.permute.xlu0 3
  %623 = vperm.xlu0 %622, %v71
  %v624 = vpop.permute.xlu0 %623
  %626 = vset.pattern.permute.xlu0 3
  %627 = vperm.xlu0 %626, %v72
  %v628 = vpop.permute.xlu0 %627
  %630 = vset.pattern.permute.xlu0 3
  %631 = vperm.xlu0 %630, %v73
  %v632 = vpop.permute.xlu0 %631
  %634 = vset.pattern.permute.xlu0 3
  %635 = vperm.xlu0 %634, %v74
  %v636 = vpop.permute.xlu0 %635
  %638 = vset.pattern.permute.xlu0 3
  %639 = vperm.xlu0 %638, %v75
  %v640 = vpop.permute.xlu0 %639
  %642 = vset.pattern.permute.xlu0 3
  %643 = vperm.xlu0 %642, %v76
  %v644 = vpop.permute.xlu0 %643
  %646 = vset.pattern.permute.xlu0 3
  %647 = vperm.xlu0 %646, %v77
  %v648 = vpop.permute.xlu0 %647
  %650 = vset.pattern.permute.xlu0 3
  %651 = vperm.xlu0 %650, %v78
  %v652 = vpop.permute.xlu0 %651
  %654 = vset.pattern.permute.xlu0 3
  %655 = vperm.xlu0 %654, %v79
  %v656 = vpop.permute.xlu0 %655
  %658 = vset.pattern.permute.xlu0 3
  %659 = vperm.xlu0 %658, %v80
  %v660 = vpop.permute.xlu0 %659
  %662 = vset.pattern.permute.xlu0 3
  %663 = vperm.xlu0 %662, %v81
  %v664 = vpop.permute.xlu0 %663
  %666 = vset.pattern.permute.xlu0 3
  %667 = vperm.xlu0 %666, %v82
  %v668 = vpop.permute.xlu0 %667
  %v670 = vlaneseq
  %v671 = vshrl.u32 %v670, 7
  %v672 = vsub.s32 3, %v671
  %v673 = vrot.slane %v57, %v672
  %v674 = vmul.f32 %v572, %v673
  %v675 = vmul.f32 %v576, %v673
  %v676 = vmul.f32 %v580, %v673
  %v677 = vmul.f32 %v584, %v673
  %v678 = vmul.f32 %v588, %v673
  %v679 = vmul.f32 %v592, %v673
  %v680 = vmul.f32 %v596, %v673
  %v681 = vmul.f32 %v600, %v673
  %v682 = vmul.f32 %v604, %v673
  %v683 = vmul.f32 %v608, %v673
  %v684 = vmul.f32 %v612, %v673
  %v685 = vmul.f32 %v616, %v673
  %v686 = vmul.f32 %v620, %v673
  %v687 = vmul.f32 %v624, %v673
  %v688 = vmul.f32 %v628, %v673
  %v689 = vmul.f32 %v632, %v673
  %v690 = vmul.f32 %v636, %v673
  %v691 = vmul.f32 %v640, %v673
  %v692 = vmul.f32 %v644, %v673
  %v693 = vmul.f32 %v648, %v673
  %v694 = vmul.f32 %v652, %v673
  %v695 = vmul.f32 %v656, %v673
  %v696 = vmul.f32 %v660, %v673
  %v697 = vmul.f32 %v664, %v673
  %v698 = vmul.f32 %v668, %v673
  %v699 = vadd.f32 %v545, %v674
  %v700 = vadd.f32 %v546, %v675
  %v701 = vadd.f32 %v547, %v676
  %v702 = vadd.f32 %v548, %v677
  %v703 = vadd.f32 %v549, %v678
  %v704 = vadd.f32 %v550, %v679
  %v705 = vadd.f32 %v551, %v680
  %v706 = vadd.f32 %v552, %v681
  %v707 = vadd.f32 %v553, %v682
  %v708 = vadd.f32 %v554, %v683
  %v709 = vadd.f32 %v555, %v684
  %v710 = vadd.f32 %v556, %v685
  %v711 = vadd.f32 %v557, %v686
  %v712 = vadd.f32 %v558, %v687
  %v713 = vadd.f32 %v559, %v688
  %v714 = vadd.f32 %v560, %v689
  %v715 = vadd.f32 %v561, %v690
  %v716 = vadd.f32 %v562, %v691
  %v717 = vadd.f32 %v563, %v692
  %v718 = vadd.f32 %v564, %v693
  %v719 = vadd.f32 %v565, %v694
  %v720 = vadd.f32 %v566, %v695
  %v721 = vadd.f32 %v567, %v696
  %v722 = vadd.f32 %v568, %v697
  %v723 = vadd.f32 %v569, %v698
  %725 = vset.pattern.permute.xlu0 0
  %726 = vperm.xlu0 %725, %v83
  %v727 = vpop.permute.xlu0 %726
  %730 = vset.pattern.permute.xlu0 0
  %731 = vperm.xlu0 %730, %v84
  %v732 = vpop.permute.xlu0 %731
  %735 = vset.pattern.permute.xlu0 0
  %736 = vperm.xlu0 %735, %v85
  %v737 = vpop.permute.xlu0 %736
  %740 = vset.pattern.permute.xlu0 0
  %741 = vperm.xlu0 %740, %v86
  %v742 = vpop.permute.xlu0 %741
  %745 = vset.pattern.permute.xlu0 0
  %746 = vperm.xlu0 %745, %v87
  %v747 = vpop.permute.xlu0 %746
  %750 = vset.pattern.permute.xlu0 0
  %751 = vperm.xlu0 %750, %v88
  %v752 = vpop.permute.xlu0 %751
  %755 = vset.pattern.permute.xlu0 0
  %756 = vperm.xlu0 %755, %v89
  %v757 = vpop.permute.xlu0 %756
  %760 = vset.pattern.permute.xlu0 0
  %761 = vperm.xlu0 %760, %v90
  %v762 = vpop.permute.xlu0 %761
  %765 = vset.pattern.permute.xlu0 0
  %766 = vperm.xlu0 %765, %v91
  %v767 = vpop.permute.xlu0 %766
  %770 = vset.pattern.permute.xlu0 0
  %771 = vperm.xlu0 %770, %v92
  %v772 = vpop.permute.xlu0 %771
  %775 = vset.pattern.permute.xlu0 0
  %776 = vperm.xlu0 %775, %v93
  %v777 = vpop.permute.xlu0 %776
  %780 = vset.pattern.permute.xlu0 0
  %781 = vperm.xlu0 %780, %v94
  %v782 = vpop.permute.xlu0 %781
  %785 = vset.pattern.permute.xlu0 0
  %786 = vperm.xlu0 %785, %v95
  %v787 = vpop.permute.xlu0 %786
  %790 = vset.pattern.permute.xlu0 0
  %791 = vperm.xlu0 %790, %v96
  %v792 = vpop.permute.xlu0 %791
  %795 = vset.pattern.permute.xlu0 0
  %796 = vperm.xlu0 %795, %v97
  %v797 = vpop.permute.xlu0 %796
  %800 = vset.pattern.permute.xlu0 0
  %801 = vperm.xlu0 %800, %v98
  %v802 = vpop.permute.xlu0 %801
  %805 = vset.pattern.permute.xlu0 0
  %806 = vperm.xlu0 %805, %v99
  %v807 = vpop.permute.xlu0 %806
  %810 = vset.pattern.permute.xlu0 0
  %811 = vperm.xlu0 %810, %v100
  %v812 = vpop.permute.xlu0 %811
  %815 = vset.pattern.permute.xlu0 0
  %816 = vperm.xlu0 %815, %v101
  %v817 = vpop.permute.xlu0 %816
  %820 = vset.pattern.permute.xlu0 0
  %821 = vperm.xlu0 %820, %v102
  %v822 = vpop.permute.xlu0 %821
  %825 = vset.pattern.permute.xlu0 0
  %826 = vperm.xlu0 %825, %v103
  %v827 = vpop.permute.xlu0 %826
  %830 = vset.pattern.permute.xlu0 0
  %831 = vperm.xlu0 %830, %v104
  %v832 = vpop.permute.xlu0 %831
  %835 = vset.pattern.permute.xlu0 0
  %836 = vperm.xlu0 %835, %v105
  %v837 = vpop.permute.xlu0 %836
  %840 = vset.pattern.permute.xlu0 0
  %841 = vperm.xlu0 %840, %v106
  %v842 = vpop.permute.xlu0 %841
  %845 = vset.pattern.permute.xlu0 0
  %846 = vperm.xlu0 %845, %v107
  %v847 = vpop.permute.xlu0 %846
  %v849 = vadd.f32 %v699, %v727
  %v850 = vadd.f32 %v700, %v732
  %v851 = vadd.f32 %v701, %v737
  %v852 = vadd.f32 %v702, %v742
  %v853 = vadd.f32 %v703, %v747
  %v854 = vadd.f32 %v704, %v752
  %v855 = vadd.f32 %v705, %v757
  %v856 = vadd.f32 %v706, %v762
  %v857 = vadd.f32 %v707, %v767
  %v858 = vadd.f32 %v708, %v772
  %v859 = vadd.f32 %v709, %v777
  %v860 = vadd.f32 %v710, %v782
  %v861 = vadd.f32 %v711, %v787
  %v862 = vadd.f32 %v712, %v792
  %v863 = vadd.f32 %v713, %v797
  %v864 = vadd.f32 %v714, %v802
  %v865 = vadd.f32 %v715, %v807
  %v866 = vadd.f32 %v716, %v812
  %v867 = vadd.f32 %v717, %v817
  %v868 = vadd.f32 %v718, %v822
  %v869 = vadd.f32 %v719, %v827
  %v870 = vadd.f32 %v720, %v832
  %v871 = vadd.f32 %v721, %v837
  %v872 = vadd.f32 %v722, %v842
  %v873 = vadd.f32 %v723, %v847
  %v874 = vtanh.pop %v849
  %v875 = vtanh.pop %v850
  %v876 = vtanh.pop %v851
  %v877 = vtanh.pop %v852
  %v878 = vtanh.pop %v853
  %v879 = vtanh.pop %v854
  %v880 = vtanh.pop %v855
  %v881 = vtanh.pop %v856
  %v882 = vtanh.pop %v857
  %v883 = vtanh.pop %v858
  %v884 = vtanh.pop %v859
  %v885 = vtanh.pop %v860
  %v886 = vtanh.pop %v861
  %v887 = vtanh.pop %v862
  %v888 = vtanh.pop %v863
  %v889 = vtanh.pop %v864
  %v890 = vtanh.pop %v865
  %v891 = vtanh.pop %v866
  %v892 = vtanh.pop %v867
  %v893 = vtanh.pop %v868
  %v894 = vtanh.pop %v869
  %v895 = vtanh.pop %v870
  %v896 = vtanh.pop %v871
  %v897 = vtanh.pop %v872
  %v898 = vtanh.pop %v873
  %v899 = vld [vmem:[%s3] sm:$0xff]
  %v900 = vld [vmem:[%s3 + $0x8] sm:$0xff]
  %v901 = vld [vmem:[%s3 + $0x10] sm:$0xff]
  %v902 = vld [vmem:[%s3 + $0x18] sm:$0xff]
  %v903 = vld [vmem:[%s3 + $0x20] sm:$0xff]
  %v904 = vld [vmem:[%s3 + $0x28] sm:$0xff]
  %v905 = vld [vmem:[%s3 + $0x30] sm:$0xff]
  %v906 = vld [vmem:[%s3 + $0x38] sm:$0xff]
  %v907 = vld [vmem:[%s3 + $0x40] sm:$0xff]
  %v908 = vld [vmem:[%s3 + $0x48] sm:$0xff]
  %v909 = vld [vmem:[%s3 + $0x50] sm:$0xff]
  %v910 = vld [vmem:[%s3 + $0x58] sm:$0xff]
  %v911 = vld [vmem:[%s3 + $0x60] sm:$0x33]
  %v912 = vld [vmem:[%s4] sm:$0xff]
  %v913 = vld [vmem:[%s4 + $0x8] sm:$0xff]
  %v914 = vld [vmem:[%s4 + $0x10] sm:$0xff]
  %v915 = vld [vmem:[%s4 + $0x18] sm:$0xff]
  %v916 = vld [vmem:[%s4 + $0x20] sm:$0xff]
  %v917 = vld [vmem:[%s4 + $0x28] sm:$0xff]
  %v918 = vld [vmem:[%s4 + $0x30] sm:$0xff]
  %v919 = vld [vmem:[%s4 + $0x38] sm:$0xff]
  %v920 = vld [vmem:[%s4 + $0x40] sm:$0xff]
  %v921 = vld [vmem:[%s4 + $0x48] sm:$0xff]
  %v922 = vld [vmem:[%s4 + $0x50] sm:$0xff]
  %v923 = vld [vmem:[%s4 + $0x58] sm:$0xff]
  %v924 = vld [vmem:[%s4 + $0x60] sm:$0xf]
  %v925 = vpack.c.bf16 %v875, %v874
  %v926 = vpack.c.bf16 %v877, %v876
  %v927 = vpack.c.bf16 %v879, %v878
  %v928 = vpack.c.bf16 %v881, %v880
  %v929 = vpack.c.bf16 %v883, %v882
  %v930 = vpack.c.bf16 %v885, %v884
  %v931 = vpack.c.bf16 %v887, %v886
  %v932 = vpack.c.bf16 %v889, %v888
  %v933 = vpack.c.bf16 %v891, %v890
  %v934 = vpack.c.bf16 %v893, %v892
  %v935 = vpack.c.bf16 %v895, %v894
  %v936 = vpack.c.bf16 %v897, %v896
  %v937 = vpack.c.bf16 %v898, %v898
  %939 = vset.pattern.permute.xlu0 0
  %940 = vperm.xlu0 %939, %v912
  %v941 = vpop.permute.xlu0 %940
  %944 = vset.pattern.permute.xlu0 0
  %945 = vperm.xlu0 %944, %v913
  %v946 = vpop.permute.xlu0 %945
  %949 = vset.pattern.permute.xlu0 0
  %950 = vperm.xlu0 %949, %v914
  %v951 = vpop.permute.xlu0 %950
  %954 = vset.pattern.permute.xlu0 0
  %955 = vperm.xlu0 %954, %v915
  %v956 = vpop.permute.xlu0 %955
  %959 = vset.pattern.permute.xlu0 0
  %960 = vperm.xlu0 %959, %v916
  %v961 = vpop.permute.xlu0 %960
  %964 = vset.pattern.permute.xlu0 0
  %965 = vperm.xlu0 %964, %v917
  %v966 = vpop.permute.xlu0 %965
  %969 = vset.pattern.permute.xlu0 0
  %970 = vperm.xlu0 %969, %v918
  %v971 = vpop.permute.xlu0 %970
  %974 = vset.pattern.permute.xlu0 0
  %975 = vperm.xlu0 %974, %v919
  %v976 = vpop.permute.xlu0 %975
  %979 = vset.pattern.permute.xlu0 0
  %980 = vperm.xlu0 %979, %v920
  %v981 = vpop.permute.xlu0 %980
  %984 = vset.pattern.permute.xlu0 0
  %985 = vperm.xlu0 %984, %v921
  %v986 = vpop.permute.xlu0 %985
  %989 = vset.pattern.permute.xlu0 0
  %990 = vperm.xlu0 %989, %v922
  %v991 = vpop.permute.xlu0 %990
  %994 = vset.pattern.permute.xlu0 0
  %995 = vperm.xlu0 %994, %v923
  %v996 = vpop.permute.xlu0 %995
  %999 = vset.pattern.permute.xlu0 0
  %1000 = vperm.xlu0 %999, %v924
  %v1001 = vpop.permute.xlu0 %1000
  %v1016 = vunpack.c.l.b16 %v899
  %v1017 = vunpack.c.h.b16 %v899
  %v1018 = vunpack.c.l.b16 %v900
  %v1019 = vunpack.c.h.b16 %v900
  %v1020 = vunpack.c.l.b16 %v901
  %v1021 = vunpack.c.h.b16 %v901
  %v1022 = vunpack.c.l.b16 %v902
  %v1023 = vunpack.c.h.b16 %v902
  %v1024 = vunpack.c.l.b16 %v903
  %v1025 = vunpack.c.h.b16 %v903
  %v1026 = vunpack.c.l.b16 %v904
  %v1027 = vunpack.c.h.b16 %v904
  %v1028 = vunpack.c.l.b16 %v905
  %v1029 = vunpack.c.h.b16 %v905
  %v1030 = vunpack.c.l.b16 %v906
  %v1031 = vunpack.c.h.b16 %v906
  %v1032 = vunpack.c.l.b16 %v907
  %v1033 = vunpack.c.h.b16 %v907
  %v1034 = vunpack.c.l.b16 %v908
  %v1035 = vunpack.c.h.b16 %v908
  %v1036 = vunpack.c.l.b16 %v909
  %v1037 = vunpack.c.h.b16 %v909
  %v1038 = vunpack.c.l.b16 %v910
  %v1039 = vunpack.c.h.b16 %v910
  %v1040 = vunpack.c.l.b16 %v911
  %v1041 = vunpack.c.h.b16 %v911
  %v1042 = vpack.c.b16 %v1018, %v1016
  %v1043 = vpack.c.b16 %v1019, %v1017
  %v1044 = vpack.c.b16 %v1022, %v1020
  %v1045 = vpack.c.b16 %v1023, %v1021
  %v1046 = vpack.c.b16 %v1026, %v1024
  %v1047 = vpack.c.b16 %v1027, %v1025
  %v1048 = vpack.c.b16 %v1030, %v1028
  %v1049 = vpack.c.b16 %v1031, %v1029
  %v1050 = vpack.c.b16 %v1034, %v1032
  %v1051 = vpack.c.b16 %v1035, %v1033
  %v1052 = vpack.c.b16 %v1038, %v1036
  %v1053 = vpack.c.b16 %v1039, %v1037
  %v1054 = vpack.c.b16 %v1040, %v1040
  %v1055 = vpack.c.b16 %v1041, %v1041
  %vm1063 = vcmask 588800
  %v1065 = vsel %vm1063, %v1043, 0
  %v1068 = vsel %vm1063, %v1045, 0
  %v1071 = vsel %vm1063, %v1047, 0
  %v1074 = vsel %vm1063, %v1049, 0
  %v1077 = vsel %vm1063, %v1051, 0
  %v1080 = vsel %vm1063, %v1053, 0
  %v1083 = vsel %vm1063, %v1055, 0
  %vm1085 = vcmask 1043456
  %v1087 = vsel %vm1085, %v937, 0
  %1089 = vmatprep.subr.bf16.mxu0 0
  %1090 = vmatpush1.bf16.msra.mxu0 %v925
  %1091 = vmatprep.subr.bf16.mxu0 0
  %1092 = vmatpush1.bf16.msra.mxu0 %v926
  %1093 = vmatprep.subr.bf16.mxu0 0
  %1094 = vmatpush1.bf16.msra.mxu0 %v927
  %1095 = vmatprep.subr.bf16.mxu0 0
  %1096 = vmatpush1.bf16.msra.mxu0 %v928
  %1097 = vmatprep.subr.bf16.mxu0 0
  %1098 = vmatpush1.bf16.msra.mxu0 %v929
  %1099 = vmatprep.subr.bf16.mxu0 0
  %1100 = vmatpush1.bf16.msra.mxu0 %v930
  %1101 = vmatprep.subr.bf16.mxu0 0
  %1102 = vmatpush1.bf16.msra.mxu0 %v931
  %1103 = vmatprep.subr.bf16.mxu0 0
  %1104 = vmatpush1.bf16.msra.mxu0 %v932
  %1105 = vmatprep.subr.bf16.mxu0 0
  %1106 = vmatpush1.bf16.msra.mxu0 %v933
  %1107 = vmatprep.subr.bf16.mxu0 0
  %1108 = vmatpush1.bf16.msra.mxu0 %v934
  %1109 = vmatprep.subr.bf16.mxu0 0
  %1110 = vmatpush1.bf16.msra.mxu0 %v935
  %1111 = vmatprep.subr.bf16.mxu0 0
  %1112 = vmatpush1.bf16.msra.mxu0 %v936
  %1113 = vmatprep.subr.bf16.mxu0 0
  %1114 = vmatpush1.bf16.msra.mxu0 %v1087
  %1115 = vmatprep.subr.bf16.mxu0 0
  %1116 = vmatpush1.bf16.msra.mxu0 0
  %1117 = vmatprep.subr.bf16.mxu0 0
  %1118 = vmatpush1.bf16.msra.mxu0 0
  %1119 = vmatprep.subr.bf16.mxu0 0
  %1120 = vmatpush1.bf16.msra.mxu0 0
  %1121 = vmatprep.mubr.bf16.mxu0 %v1065
  %1122 = vmatmul.mubr.bf16.gmra.mrb[0].mxu0 %v1042
  %v1123 = vpop.f32.mrb[0].mxu0
  %v1124 = vadd.f32 %v941, %v1123
  %v1125 = vpop.f32.mrb[0].mxu0
  %v1126 = vpop.f32.mrb[0].mxu0
  %v1127 = vadd.f32 %v946, %v1126
  %v1128 = vpop.f32.mrb[0].mxu0
  %1129 = vmatprep.mubr.bf16.mxu0 %v1068
  %1130 = vmatmul.mubr.bf16.gmra.mrb[0].mxu0 %v1044
  %v1131 = vpop.f32.mrb[0].mxu0
  %v1132 = vadd.f32 %v951, %v1131
  %v1133 = vpop.f32.mrb[0].mxu0
  %v1134 = vpop.f32.mrb[0].mxu0
  %v1135 = vadd.f32 %v956, %v1134
  %v1136 = vpop.f32.mrb[0].mxu0
  %1137 = vmatprep.mubr.bf16.mxu0 %v1071
  %1138 = vmatmul.mubr.bf16.gmra.mrb[0].mxu0 %v1046
  %v1139 = vpop.f32.mrb[0].mxu0
  %v1140 = vadd.f32 %v961, %v1139
  %v1141 = vpop.f32.mrb[0].mxu0
  %v1142 = vpop.f32.mrb[0].mxu0
  %v1143 = vadd.f32 %v966, %v1142
  %v1144 = vpop.f32.mrb[0].mxu0
  %1145 = vmatprep.mubr.bf16.mxu0 %v1074
  %1146 = vmatmul.mubr.bf16.gmra.mrb[0].mxu0 %v1048
  %v1147 = vpop.f32.mrb[0].mxu0
  %v1148 = vadd.f32 %v971, %v1147
  %v1149 = vpop.f32.mrb[0].mxu0
  %v1150 = vpop.f32.mrb[0].mxu0
  %v1151 = vadd.f32 %v976, %v1150
  %v1152 = vpop.f32.mrb[0].mxu0
  %1153 = vmatprep.mubr.bf16.mxu0 %v1077
  %1154 = vmatmul.mubr.bf16.gmra.mrb[0].mxu0 %v1050
  %v1155 = vpop.f32.mrb[0].mxu0
  %v1156 = vadd.f32 %v981, %v1155
  %v1157 = vpop.f32.mrb[0].mxu0
  %v1158 = vpop.f32.mrb[0].mxu0
  %v1159 = vadd.f32 %v986, %v1158
  %v1160 = vpop.f32.mrb[0].mxu0
  %1161 = vmatprep.mubr.bf16.mxu0 %v1080
  %1162 = vmatmul.mubr.bf16.gmra.mrb[0].mxu0 %v1052
  %v1163 = vpop.f32.mrb[0].mxu0
  %v1164 = vadd.f32 %v991, %v1163
  %v1165 = vpop.f32.mrb[0].mxu0
  %v1166 = vpop.f32.mrb[0].mxu0
  %v1167 = vadd.f32 %v996, %v1166
  %v1168 = vpop.f32.mrb[0].mxu0
  %1169 = vmatprep.mubr.bf16.mxu0 %v1083
  %1170 = vmatmul.mubr.bf16.gmra.mrb[0].mxu0 %v1054
  %v1171 = vpop.f32.mrb[0].mxu0
  %v1172 = vadd.f32 %v1001, %v1171
  %v1173 = vpop.f32.mrb[0].mxu0
  %v1174 = vpop.f32.mrb[0].mxu0
  %v1175 = vpop.f32.mrb[0].mxu0
  %1176 = vdwg.mxu0
  %v1177 = vtanh.pop %v1124
  %v1178 = vtanh.pop %v1127
  %v1179 = vtanh.pop %v1132
  %v1180 = vtanh.pop %v1135
  %v1181 = vtanh.pop %v1140
  %v1182 = vtanh.pop %v1143
  %v1183 = vtanh.pop %v1148
  %v1184 = vtanh.pop %v1151
  %v1185 = vtanh.pop %v1156
  %v1186 = vtanh.pop %v1159
  %v1187 = vtanh.pop %v1164
  %v1188 = vtanh.pop %v1167
  %v1189 = vtanh.pop %v1172
  %v1190 = vld [vmem:[%s5] sm:$0xf]
  %v1191 = vld [vmem:[%s5 + $0x4] sm:$0xf]
  %v1192 = vld [vmem:[%s5 + $0x8] sm:$0xf]
  %v1193 = vld [vmem:[%s5 + $0xc] sm:$0xf]
  %v1194 = vld [vmem:[%s5 + $0x10] sm:$0xf]
  %v1195 = vld [vmem:[%s5 + $0x14] sm:$0xf]
  %v1196 = vld [vmem:[%s5 + $0x18] sm:$0x1]
  %v1197 = vld [vmem:[%s6] sm:$0xff]
  %v1198 = vld [vmem:[%s6 + $0x8] sm:$0xff]
  %v1199 = vld [vmem:[%s6 + $0x10] sm:$0xff]
  %v1200 = vld [vmem:[%s6 + $0x18] sm:$0xff]
  %v1201 = vld [vmem:[%s6 + $0x20] sm:$0xff]
  %v1202 = vld [vmem:[%s6 + $0x28] sm:$0xff]
  %v1203 = vld [vmem:[%s6 + $0x30] sm:$0x3]
  %v1204 = vpack.c.bf16 %v1178, %v1177
  %v1205 = vpack.c.bf16 %v1180, %v1179
  %v1206 = vpack.c.bf16 %v1182, %v1181
  %v1207 = vpack.c.bf16 %v1184, %v1183
  %v1208 = vpack.c.bf16 %v1186, %v1185
  %v1209 = vpack.c.bf16 %v1188, %v1187
  %v1210 = vpack.c.bf16 %v1189, %v1189
  %1212 = vset.pattern.permute.xlu0 0
  %1213 = vperm.xlu0 %1212, %v1197
  %v1214 = vpop.permute.xlu0 %1213
  %1217 = vset.pattern.permute.xlu0 0
  %1218 = vperm.xlu0 %1217, %v1198
  %v1219 = vpop.permute.xlu0 %1218
  %1222 = vset.pattern.permute.xlu0 0
  %1223 = vperm.xlu0 %1222, %v1199
  %v1224 = vpop.permute.xlu0 %1223
  %1227 = vset.pattern.permute.xlu0 0
  %1228 = vperm.xlu0 %1227, %v1200
  %v1229 = vpop.permute.xlu0 %1228
  %1232 = vset.pattern.permute.xlu0 0
  %1233 = vperm.xlu0 %1232, %v1201
  %v1234 = vpop.permute.xlu0 %1233
  %1237 = vset.pattern.permute.xlu0 0
  %1238 = vperm.xlu0 %1237, %v1202
  %v1239 = vpop.permute.xlu0 %1238
  %1242 = vset.pattern.permute.xlu0 0
  %1243 = vperm.xlu0 %1242, %v1203
  %v1244 = vpop.permute.xlu0 %1243
  %v1253 = vunpack.c.l.b16 %v1190
  %v1254 = vunpack.c.l.b16 %v1191
  %v1255 = vunpack.c.l.b16 %v1192
  %v1256 = vunpack.c.l.b16 %v1193
  %v1257 = vunpack.c.l.b16 %v1194
  %v1258 = vunpack.c.l.b16 %v1195
  %v1259 = vunpack.c.l.b16 %v1196
  %v1260 = vpack.c.b16 %v1254, %v1253
  %v1261 = vpack.c.b16 %v1256, %v1255
  %v1262 = vpack.c.b16 %v1258, %v1257
  %v1263 = vpack.c.b16 %v1259, %v1259
  %vm1264 = vcmask 818176
  %v1266 = vsel %vm1264, %v1260, 0
  %v1269 = vsel %vm1264, %v1261, 0
  %v1272 = vsel %vm1264, %v1262, 0
  %v1275 = vsel %vm1264, %v1263, 0
  %vm1277 = vcmask 1041408
  %v1279 = vsel %vm1277, %v1210, 0
  %1281 = vmatprep.subr.bf16.mxu0 0
  %1282 = vmatpush1.bf16.msra.mxu0 %v1204
  %1283 = vmatprep.subr.bf16.mxu0 0
  %1284 = vmatpush1.bf16.msra.mxu0 %v1205
  %1285 = vmatprep.subr.bf16.mxu0 0
  %1286 = vmatpush1.bf16.msra.mxu0 %v1206
  %1287 = vmatprep.subr.bf16.mxu0 0
  %1288 = vmatpush1.bf16.msra.mxu0 %v1207
  %1289 = vmatprep.subr.bf16.mxu0 0
  %1290 = vmatpush1.bf16.msra.mxu0 %v1208
  %1291 = vmatprep.subr.bf16.mxu0 0
  %1292 = vmatpush1.bf16.msra.mxu0 %v1209
  %1293 = vmatprep.subr.bf16.mxu0 0
  %1294 = vmatpush1.bf16.msra.mxu0 %v1279
  %1295 = vmatprep.subr.bf16.mxu0 0
  %1296 = vmatpush1.bf16.msra.mxu0 0
  %1297 = vmatprep.subr.bf16.mxu0 0
  %1298 = vmatpush1.bf16.msra.mxu0 0
  %1299 = vmatprep.subr.bf16.mxu0 0
  %1300 = vmatpush1.bf16.msra.mxu0 0
  %1301 = vmatprep.subr.bf16.mxu0 0
  %1302 = vmatpush1.bf16.msra.mxu0 0
  %1303 = vmatprep.subr.bf16.mxu0 0
  %1304 = vmatpush1.bf16.msra.mxu0 0
  %1305 = vmatprep.subr.bf16.mxu0 0
  %1306 = vmatpush1.bf16.msra.mxu0 0
  %1307 = vmatprep.subr.bf16.mxu0 0
  %1308 = vmatpush1.bf16.msra.mxu0 0
  %1309 = vmatprep.subr.bf16.mxu0 0
  %1310 = vmatpush1.bf16.msra.mxu0 0
  %1311 = vmatprep.subr.bf16.mxu0 0
  %1312 = vmatpush1.bf16.msra.mxu0 0
  %1313 = vmatprep.mubr.bf16.mxu0 0
  %1314 = vmatmul.mubr.bf16.gmra.mrb[0].mxu0 %v1266
  %v1315 = vpop.f32.mrb[0].mxu0
  %v1316 = vadd.f32 %v1214, %v1315
  %v1317 = vpop.f32.mrb[0].mxu0
  %v1318 = vpop.f32.mrb[0].mxu0
  %v1319 = vadd.f32 %v1219, %v1318
  %v1320 = vpop.f32.mrb[0].mxu0
  %1321 = vmatprep.mubr.bf16.mxu0 0
  %1322 = vmatmul.mubr.bf16.gmra.mrb[0].mxu0 %v1269
  %v1323 = vpop.f32.mrb[0].mxu0
  %v1324 = vadd.f32 %v1224, %v1323
  %v1325 = vpop.f32.mrb[0].mxu0
  %v1326 = vpop.f32.mrb[0].mxu0
  %v1327 = vadd.f32 %v1229, %v1326
  %v1328 = vpop.f32.mrb[0].mxu0
  %1329 = vmatprep.mubr.bf16.mxu0 0
  %1330 = vmatmul.mubr.bf16.gmra.mrb[0].mxu0 %v1272
  %v1331 = vpop.f32.mrb[0].mxu0
  %v1332 = vadd.f32 %v1234, %v1331
  %v1333 = vpop.f32.mrb[0].mxu0
  %v1334 = vpop.f32.mrb[0].mxu0
  %v1335 = vadd.f32 %v1239, %v1334
  %v1336 = vpop.f32.mrb[0].mxu0
  %1337 = vmatprep.mubr.bf16.mxu0 0
  %1338 = vmatmul.mubr.bf16.gmra.mrb[0].mxu0 %v1275
  %v1339 = vpop.f32.mrb[0].mxu0
  %v1340 = vadd.f32 %v1244, %v1339
  %v1341 = vpop.f32.mrb[0].mxu0
  %v1342 = vpop.f32.mrb[0].mxu0
  %v1343 = vpop.f32.mrb[0].mxu0
  %1344 = vdwg.mxu0
  %v1345 = vtanh.pop %v1316
  %v1346 = vtanh.pop %v1319
  %v1347 = vtanh.pop %v1324
  %v1348 = vtanh.pop %v1327
  %v1349 = vtanh.pop %v1332
  %v1350 = vtanh.pop %v1335
  %v1351 = vtanh.pop %v1340
  %v1352 = vld [vmem:[%s7] sm:$0x3]
  %v1353 = vld [vmem:[%s8] sm:$0x7]
  %v1354 = vpack.c.bf16 %v1346, %v1345
  %v1355 = vpack.c.bf16 %v1348, %v1347
  %v1356 = vpack.c.bf16 %v1350, %v1349
  %v1357 = vpack.c.bf16 %v1351, %v1351
  %1359 = vset.pattern.permute.xlu0 0
  %1360 = vperm.xlu0 %1359, %v1353
  %v1361 = vpop.permute.xlu0 %1360
  %vm1363 = vcmask 408576
  %v1365 = vsel %vm1363, %v1352, 0
  %vm1367 = vcmask 1040384
  %v1369 = vsel %vm1367, %v1357, 0
  %1371 = vmatprep.subr.bf16.mxu0 0
  %1372 = vmatpush1.bf16.msra.mxu0 %v1354
  %1373 = vmatprep.subr.bf16.mxu0 0
  %1374 = vmatpush1.bf16.msra.mxu0 %v1355
  %1375 = vmatprep.subr.bf16.mxu0 0
  %1376 = vmatpush1.bf16.msra.mxu0 %v1356
  %1377 = vmatprep.subr.bf16.mxu0 0
  %1378 = vmatpush1.bf16.msra.mxu0 %v1369
  %1379 = vmatprep.subr.bf16.mxu0 0
  %1380 = vmatpush1.bf16.msra.mxu0 0
  %1381 = vmatprep.subr.bf16.mxu0 0
  %1382 = vmatpush1.bf16.msra.mxu0 0
  %1383 = vmatprep.subr.bf16.mxu0 0
  %1384 = vmatpush1.bf16.msra.mxu0 0
  %1385 = vmatprep.subr.bf16.mxu0 0
  %1386 = vmatpush1.bf16.msra.mxu0 0
  %1387 = vmatprep.subr.bf16.mxu0 0
  %1388 = vmatpush1.bf16.msra.mxu0 0
  %1389 = vmatprep.subr.bf16.mxu0 0
  %1390 = vmatpush1.bf16.msra.mxu0 0
  %1391 = vmatprep.subr.bf16.mxu0 0
  %1392 = vmatpush1.bf16.msra.mxu0 0
  %1393 = vmatprep.subr.bf16.mxu0 0
  %1394 = vmatpush1.bf16.msra.mxu0 0
  %1395 = vmatprep.subr.bf16.mxu0 0
  %1396 = vmatpush1.bf16.msra.mxu0 0
  %1397 = vmatprep.subr.bf16.mxu0 0
  %1398 = vmatpush1.bf16.msra.mxu0 0
  %1399 = vmatprep.subr.bf16.mxu0 0
  %1400 = vmatpush1.bf16.msra.mxu0 0
  %1401 = vmatprep.subr.bf16.mxu0 0
  %1402 = vmatpush1.bf16.msra.mxu0 0
  %1403 = vmatprep.mubr.bf16.mxu0 0
  %1404 = vmatmul.mubr.bf16.gmra.mrb[0].mxu0 %v1365
  %v1405 = vpop.f32.mrb[0].mxu0
  %v1406 = vadd.f32 %v1361, %v1405
  %v1407 = vpop.f32.mrb[0].mxu0
  %v1408 = vpop.f32.mrb[0].mxu0
  %v1409 = vpop.f32.mrb[0].mxu0
  %1410 = vdwg.mxu0
  %v1411 = vtanh.pop %v1406
  %v1412 = vld [vmem:[%s9] sm:$0xff]
  %v1413 = vld [vmem:[%s9 + $0x8] sm:$0xff]
  %v1414 = vld [vmem:[%s9 + $0x10] sm:$0xff]
  %v1415 = vld [vmem:[%s9 + $0x18] sm:$0xff]
  %v1416 = vld [vmem:[%s9 + $0x20] sm:$0xff]
  %v1417 = vld [vmem:[%s9 + $0x28] sm:$0xff]
  %v1418 = vld [vmem:[%s9 + $0x30] sm:$0x3]
  %v1419 = vld [vmem:[%s10] sm:$0xff]
  %v1420 = vld [vmem:[%s10 + $0x8] sm:$0xff]
  %v1421 = vld [vmem:[%s10 + $0x10] sm:$0xff]
  %v1422 = vld [vmem:[%s10 + $0x18] sm:$0xff]
  %v1423 = vld [vmem:[%s10 + $0x20] sm:$0xff]
  %v1424 = vld [vmem:[%s10 + $0x28] sm:$0xff]
  %v1425 = vld [vmem:[%s10 + $0x30] sm:$0x3]
  %1427 = vset.pattern.permute.xlu0 0
  %1428 = vperm.xlu0 %1427, %v1412
  %v1429 = vpop.permute.xlu0 %1428
  %1432 = vset.pattern.permute.xlu0 0
  %1433 = vperm.xlu0 %1432, %v1413
  %v1434 = vpop.permute.xlu0 %1433
  %1437 = vset.pattern.permute.xlu0 0
  %1438 = vperm.xlu0 %1437, %v1414
  %v1439 = vpop.permute.xlu0 %1438
  %1442 = vset.pattern.permute.xlu0 0
  %1443 = vperm.xlu0 %1442, %v1415
  %v1444 = vpop.permute.xlu0 %1443
  %1447 = vset.pattern.permute.xlu0 0
  %1448 = vperm.xlu0 %1447, %v1416
  %v1449 = vpop.permute.xlu0 %1448
  %1452 = vset.pattern.permute.xlu0 0
  %1453 = vperm.xlu0 %1452, %v1417
  %v1454 = vpop.permute.xlu0 %1453
  %1457 = vset.pattern.permute.xlu0 0
  %1458 = vperm.xlu0 %1457, %v1418
  %v1459 = vpop.permute.xlu0 %1458
  %v1461 = vlaneseq
  %v1462 = vshrl.u32 %v1461, 7
  %v1463 = vsub.s32 0, %v1462
  %v1464 = vrot.slane %v1411, %v1463
  %v1465 = vmul.f32 %v1429, %v1464
  %v1466 = vmul.f32 %v1434, %v1464
  %v1467 = vmul.f32 %v1439, %v1464
  %v1468 = vmul.f32 %v1444, %v1464
  %v1469 = vmul.f32 %v1449, %v1464
  %v1470 = vmul.f32 %v1454, %v1464
  %v1471 = vmul.f32 %v1459, %v1464
  %1472 = vset.pattern.permute.xlu0 1
  %1473 = vperm.xlu0 %1472, %v1412
  %v1474 = vpop.permute.xlu0 %1473
  %1476 = vset.pattern.permute.xlu0 1
  %1477 = vperm.xlu0 %1476, %v1413
  %v1478 = vpop.permute.xlu0 %1477
  %1480 = vset.pattern.permute.xlu0 1
  %1481 = vperm.xlu0 %1480, %v1414
  %v1482 = vpop.permute.xlu0 %1481
  %1484 = vset.pattern.permute.xlu0 1
  %1485 = vperm.xlu0 %1484, %v1415
  %v1486 = vpop.permute.xlu0 %1485
  %1488 = vset.pattern.permute.xlu0 1
  %1489 = vperm.xlu0 %1488, %v1416
  %v1490 = vpop.permute.xlu0 %1489
  %1492 = vset.pattern.permute.xlu0 1
  %1493 = vperm.xlu0 %1492, %v1417
  %v1494 = vpop.permute.xlu0 %1493
  %1496 = vset.pattern.permute.xlu0 1
  %1497 = vperm.xlu0 %1496, %v1418
  %v1498 = vpop.permute.xlu0 %1497
  %v1500 = vlaneseq
  %v1501 = vshrl.u32 %v1500, 7
  %v1502 = vsub.s32 1, %v1501
  %v1503 = vrot.slane %v1411, %v1502
  %v1504 = vmul.f32 %v1474, %v1503
  %v1505 = vmul.f32 %v1478, %v1503
  %v1506 = vmul.f32 %v1482, %v1503
  %v1507 = vmul.f32 %v1486, %v1503
  %v1508 = vmul.f32 %v1490, %v1503
  %v1509 = vmul.f32 %v1494, %v1503
  %v1510 = vmul.f32 %v1498, %v1503
  %v1511 = vadd.f32 %v1465, %v1504
  %v1512 = vadd.f32 %v1466, %v1505
  %v1513 = vadd.f32 %v1467, %v1506
  %v1514 = vadd.f32 %v1468, %v1507
  %v1515 = vadd.f32 %v1469, %v1508
  %v1516 = vadd.f32 %v1470, %v1509
  %v1517 = vadd.f32 %v1471, %v1510
  %1518 = vset.pattern.permute.xlu0 2
  %1519 = vperm.xlu0 %1518, %v1412
  %v1520 = vpop.permute.xlu0 %1519
  %1522 = vset.pattern.permute.xlu0 2
  %1523 = vperm.xlu0 %1522, %v1413
  %v1524 = vpop.permute.xlu0 %1523
  %1526 = vset.pattern.permute.xlu0 2
  %1527 = vperm.xlu0 %1526, %v1414
  %v1528 = vpop.permute.xlu0 %1527
  %1530 = vset.pattern.permute.xlu0 2
  %1531 = vperm.xlu0 %1530, %v1415
  %v1532 = vpop.permute.xlu0 %1531
  %1534 = vset.pattern.permute.xlu0 2
  %1535 = vperm.xlu0 %1534, %v1416
  %v1536 = vpop.permute.xlu0 %1535
  %1538 = vset.pattern.permute.xlu0 2
  %1539 = vperm.xlu0 %1538, %v1417
  %v1540 = vpop.permute.xlu0 %1539
  %1542 = vset.pattern.permute.xlu0 2
  %1543 = vperm.xlu0 %1542, %v1418
  %v1544 = vpop.permute.xlu0 %1543
  %v1546 = vlaneseq
  %v1547 = vshrl.u32 %v1546, 7
  %v1548 = vsub.s32 2, %v1547
  %v1549 = vrot.slane %v1411, %v1548
  %v1550 = vmul.f32 %v1520, %v1549
  %v1551 = vmul.f32 %v1524, %v1549
  %v1552 = vmul.f32 %v1528, %v1549
  %v1553 = vmul.f32 %v1532, %v1549
  %v1554 = vmul.f32 %v1536, %v1549
  %v1555 = vmul.f32 %v1540, %v1549
  %v1556 = vmul.f32 %v1544, %v1549
  %v1557 = vadd.f32 %v1511, %v1550
  %v1558 = vadd.f32 %v1512, %v1551
  %v1559 = vadd.f32 %v1513, %v1552
  %v1560 = vadd.f32 %v1514, %v1553
  %v1561 = vadd.f32 %v1515, %v1554
  %v1562 = vadd.f32 %v1516, %v1555
  %v1563 = vadd.f32 %v1517, %v1556
  %1565 = vset.pattern.permute.xlu0 0
  %1566 = vperm.xlu0 %1565, %v1419
  %v1567 = vpop.permute.xlu0 %1566
  %1570 = vset.pattern.permute.xlu0 0
  %1571 = vperm.xlu0 %1570, %v1420
  %v1572 = vpop.permute.xlu0 %1571
  %1575 = vset.pattern.permute.xlu0 0
  %1576 = vperm.xlu0 %1575, %v1421
  %v1577 = vpop.permute.xlu0 %1576
  %1580 = vset.pattern.permute.xlu0 0
  %1581 = vperm.xlu0 %1580, %v1422
  %v1582 = vpop.permute.xlu0 %1581
  %1585 = vset.pattern.permute.xlu0 0
  %1586 = vperm.xlu0 %1585, %v1423
  %v1587 = vpop.permute.xlu0 %1586
  %1590 = vset.pattern.permute.xlu0 0
  %1591 = vperm.xlu0 %1590, %v1424
  %v1592 = vpop.permute.xlu0 %1591
  %1595 = vset.pattern.permute.xlu0 0
  %1596 = vperm.xlu0 %1595, %v1425
  %v1597 = vpop.permute.xlu0 %1596
  %v1599 = vadd.f32 %v1557, %v1567
  %v1600 = vadd.f32 %v1558, %v1572
  %v1601 = vadd.f32 %v1559, %v1577
  %v1602 = vadd.f32 %v1560, %v1582
  %v1603 = vadd.f32 %v1561, %v1587
  %v1604 = vadd.f32 %v1562, %v1592
  %v1605 = vadd.f32 %v1563, %v1597
  %v1606 = vtanh.pop %v1599
  %v1607 = vtanh.pop %v1600
  %v1608 = vtanh.pop %v1601
  %v1609 = vtanh.pop %v1602
  %v1610 = vtanh.pop %v1603
  %v1611 = vtanh.pop %v1604
  %v1612 = vtanh.pop %v1605
  %v1613 = vld [vmem:[%s11] sm:$0xf]
  %v1614 = vld [vmem:[%s11 + $0x4] sm:$0xf]
  %v1615 = vld [vmem:[%s11 + $0x8] sm:$0xf]
  %v1616 = vld [vmem:[%s11 + $0xc] sm:$0xf]
  %v1617 = vld [vmem:[%s11 + $0x10] sm:$0xf]
  %v1618 = vld [vmem:[%s11 + $0x14] sm:$0xf]
  %v1619 = vld [vmem:[%s11 + $0x18] sm:$0xf]
  %v1620 = vld [vmem:[%s11 + $0x1c] sm:$0xf]
  %v1621 = vld [vmem:[%s11 + $0x20] sm:$0xf]
  %v1622 = vld [vmem:[%s11 + $0x24] sm:$0xf]
  %v1623 = vld [vmem:[%s11 + $0x28] sm:$0xf]
  %v1624 = vld [vmem:[%s11 + $0x2c] sm:$0xf]
  %v1625 = vld [vmem:[%s11 + $0x30] sm:$0x3]
  %v1626 = vld [vmem:[%s12] sm:$0xff]
  %v1627 = vld [vmem:[%s12 + $0x8] sm:$0xff]
  %v1628 = vld [vmem:[%s12 + $0x10] sm:$0xff]
  %v1629 = vld [vmem:[%s12 + $0x18] sm:$0xff]
  %v1630 = vld [vmem:[%s12 + $0x20] sm:$0xff]
  %v1631 = vld [vmem:[%s12 + $0x28] sm:$0xff]
  %v1632 = vld [vmem:[%s12 + $0x30] sm:$0xff]
  %v1633 = vld [vmem:[%s12 + $0x38] sm:$0xff]
  %v1634 = vld [vmem:[%s12 + $0x40] sm:$0xff]
  %v1635 = vld [vmem:[%s12 + $0x48] sm:$0xff]
  %v1636 = vld [vmem:[%s12 + $0x50] sm:$0xff]
  %v1637 = vld [vmem:[%s12 + $0x58] sm:$0xff]
  %v1638 = vld [vmem:[%s12 + $0x60] sm:$0xf]
  %v1639 = vpack.c.bf16 %v1607, %v1606
  %v1640 = vpack.c.bf16 %v1609, %v1608
  %v1641 = vpack.c.bf16 %v1611, %v1610
  %v1642 = vpack.c.bf16 %v1612, %v1612
  %1644 = vset.pattern.permute.xlu0 0
  %1645 = vperm.xlu0 %1644, %v1626
  %v1646 = vpop.permute.xlu0 %1645
  %1649 = vset.pattern.permute.xlu0 0
  %1650 = vperm.xlu0 %1649, %v1627
  %v1651 = vpop.permute.xlu0 %1650
  %1654 = vset.pattern.permute.xlu0 0
  %1655 = vperm.xlu0 %1654, %v1628
  %v1656 = vpop.permute.xlu0 %1655
  %1659 = vset.pattern.permute.xlu0 0
  %1660 = vperm.xlu0 %1659, %v1629
  %v1661 = vpop.permute.xlu0 %1660
  %1664 = vset.pattern.permute.xlu0 0
  %1665 = vperm.xlu0 %1664, %v1630
  %v1666 = vpop.permute.xlu0 %1665
  %1669 = vset.pattern.permute.xlu0 0
  %1670 = vperm.xlu0 %1669, %v1631
  %v1671 = vpop.permute.xlu0 %1670
  %1674 = vset.pattern.permute.xlu0 0
  %1675 = vperm.xlu0 %1674, %v1632
  %v1676 = vpop.permute.xlu0 %1675
  %1679 = vset.pattern.permute.xlu0 0
  %1680 = vperm.xlu0 %1679, %v1633
  %v1681 = vpop.permute.xlu0 %1680
  %1684 = vset.pattern.permute.xlu0 0
  %1685 = vperm.xlu0 %1684, %v1634
  %v1686 = vpop.permute.xlu0 %1685
  %1689 = vset.pattern.permute.xlu0 0
  %1690 = vperm.xlu0 %1689, %v1635
  %v1691 = vpop.permute.xlu0 %1690
  %1694 = vset.pattern.permute.xlu0 0
  %1695 = vperm.xlu0 %1694, %v1636
  %v1696 = vpop.permute.xlu0 %1695
  %1699 = vset.pattern.permute.xlu0 0
  %1700 = vperm.xlu0 %1699, %v1637
  %v1701 = vpop.permute.xlu0 %1700
  %1704 = vset.pattern.permute.xlu0 0
  %1705 = vperm.xlu0 %1704, %v1638
  %v1706 = vpop.permute.xlu0 %1705
  %v1721 = vunpack.c.l.b16 %v1613
  %v1722 = vunpack.c.l.b16 %v1614
  %v1723 = vunpack.c.l.b16 %v1615
  %v1724 = vunpack.c.l.b16 %v1616
  %v1725 = vunpack.c.l.b16 %v1617
  %v1726 = vunpack.c.l.b16 %v1618
  %v1727 = vunpack.c.l.b16 %v1619
  %v1728 = vunpack.c.l.b16 %v1620
  %v1729 = vunpack.c.l.b16 %v1621
  %v1730 = vunpack.c.l.b16 %v1622
  %v1731 = vunpack.c.l.b16 %v1623
  %v1732 = vunpack.c.l.b16 %v1624
  %v1733 = vunpack.c.l.b16 %v1625
  %v1734 = vpack.c.b16 %v1722, %v1721
  %v1735 = vpack.c.b16 %v1724, %v1723
  %v1736 = vpack.c.b16 %v1726, %v1725
  %v1737 = vpack.c.b16 %v1728, %v1727
  %v1738 = vpack.c.b16 %v1730, %v1729
  %v1739 = vpack.c.b16 %v1732, %v1731
  %v1740 = vpack.c.b16 %v1733, %v1733
  %v1742 = vsel %vm1363, %v1734, 0
  %v1745 = vsel %vm1363, %v1735, 0
  %v1748 = vsel %vm1363, %v1736, 0
  %v1751 = vsel %vm1363, %v1737, 0
  %v1754 = vsel %vm1363, %v1738, 0
  %v1757 = vsel %vm1363, %v1739, 0
  %v1760 = vsel %vm1363, %v1740, 0
  %v1763 = vsel %vm1367, %v1642, 0
  %1765 = vmatprep.subr.bf16.mxu0 0
  %1766 = vmatpush1.bf16.msra.mxu0 %v1639
  %1767 = vmatprep.subr.bf16.mxu0 0
  %1768 = vmatpush1.bf16.msra.mxu0 %v1640
  %1769 = vmatprep.subr.bf16.mxu0 0
  %1770 = vmatpush1.bf16.msra.mxu0 %v1641
  %1771 = vmatprep.subr.bf16.mxu0 0
  %1772 = vmatpush1.bf16.msra.mxu0 %v1763
  %1773 = vmatprep.subr.bf16.mxu0 0
  %1774 = vmatpush1.bf16.msra.mxu0 0
  %1775 = vmatprep.subr.bf16.mxu0 0
  %1776 = vmatpush1.bf16.msra.mxu0 0
  %1777 = vmatprep.subr.bf16.mxu0 0
  %1778 = vmatpush1.bf16.msra.mxu0 0
  %1779 = vmatprep.subr.bf16.mxu0 0
  %1780 = vmatpush1.bf16.msra.mxu0 0
  %1781 = vmatprep.subr.bf16.mxu0 0
  %1782 = vmatpush1.bf16.msra.mxu0 0
  %1783 = vmatprep.subr.bf16.mxu0 0
  %1784 = vmatpush1.bf16.msra.mxu0 0
  %1785 = vmatprep.subr.bf16.mxu0 0
  %1786 = vmatpush1.bf16.msra.mxu0 0
  %1787 = vmatprep.subr.bf16.mxu0 0
  %1788 = vmatpush1.bf16.msra.mxu0 0
  %1789 = vmatprep.subr.bf16.mxu0 0
  %1790 = vmatpush1.bf16.msra.mxu0 0
  %1791 = vmatprep.subr.bf16.mxu0 0
  %1792 = vmatpush1.bf16.msra.mxu0 0
  %1793 = vmatprep.subr.bf16.mxu0 0
  %1794 = vmatpush1.bf16.msra.mxu0 0
  %1795 = vmatprep.subr.bf16.mxu0 0
  %1796 = vmatpush1.bf16.msra.mxu0 0
  %1797 = vmatprep.mubr.bf16.mxu0 0
  %1798 = vmatmul.mubr.bf16.gmra.mrb[0].mxu0 %v1742
  %v1799 = vpop.f32.mrb[0].mxu0
  %v1800 = vadd.f32 %v1646, %v1799
  %v1801 = vpop.f32.mrb[0].mxu0
  %v1802 = vpop.f32.mrb[0].mxu0
  %v1803 = vadd.f32 %v1651, %v1802
  %v1804 = vpop.f32.mrb[0].mxu0
  %1805 = vmatprep.mubr.bf16.mxu0 0
  %1806 = vmatmul.mubr.bf16.gmra.mrb[0].mxu0 %v1745
  %v1807 = vpop.f32.mrb[0].mxu0
  %v1808 = vadd.f32 %v1656, %v1807
  %v1809 = vpop.f32.mrb[0].mxu0
  %v1810 = vpop.f32.mrb[0].mxu0
  %v1811 = vadd.f32 %v1661, %v1810
  %v1812 = vpop.f32.mrb[0].mxu0
  %1813 = vmatprep.mubr.bf16.mxu0 0
  %1814 = vmatmul.mubr.bf16.gmra.mrb[0].mxu0 %v1748
  %v1815 = vpop.f32.mrb[0].mxu0
  %v1816 = vadd.f32 %v1666, %v1815
  %v1817 = vpop.f32.mrb[0].mxu0
  %v1818 = vpop.f32.mrb[0].mxu0
  %v1819 = vadd.f32 %v1671, %v1818
  %v1820 = vpop.f32.mrb[0].mxu0
  %1821 = vmatprep.mubr.bf16.mxu0 0
  %1822 = vmatmul.mubr.bf16.gmra.mrb[0].mxu0 %v1751
  %v1823 = vpop.f32.mrb[0].mxu0
  %v1824 = vadd.f32 %v1676, %v1823
  %v1825 = vpop.f32.mrb[0].mxu0
  %v1826 = vpop.f32.mrb[0].mxu0
  %v1827 = vadd.f32 %v1681, %v1826
  %v1828 = vpop.f32.mrb[0].mxu0
  %1829 = vmatprep.mubr.bf16.mxu0 0
  %1830 = vmatmul.mubr.bf16.gmra.mrb[0].mxu0 %v1754
  %v1831 = vpop.f32.mrb[0].mxu0
  %v1832 = vadd.f32 %v1686, %v1831
  %v1833 = vpop.f32.mrb[0].mxu0
  %v1834 = vpop.f32.mrb[0].mxu0
  %v1835 = vadd.f32 %v1691, %v1834
  %v1836 = vpop.f32.mrb[0].mxu0
  %1837 = vmatprep.mubr.bf16.mxu0 0
  %1838 = vmatmul.mubr.bf16.gmra.mrb[0].mxu0 %v1757
  %v1839 = vpop.f32.mrb[0].mxu0
  %v1840 = vadd.f32 %v1696, %v1839
  %v1841 = vpop.f32.mrb[0].mxu0
  %v1842 = vpop.f32.mrb[0].mxu0
  %v1843 = vadd.f32 %v1701, %v1842
  %v1844 = vpop.f32.mrb[0].mxu0
  %1845 = vmatprep.mubr.bf16.mxu0 0
  %1846 = vmatmul.mubr.bf16.gmra.mrb[0].mxu0 %v1760
  %v1847 = vpop.f32.mrb[0].mxu0
  %v1848 = vadd.f32 %v1706, %v1847
  %v1849 = vpop.f32.mrb[0].mxu0
  %v1850 = vpop.f32.mrb[0].mxu0
  %v1851 = vpop.f32.mrb[0].mxu0
  %1852 = vdwg.mxu0
  %v1853 = vtanh.pop %v1800
  %v1854 = vtanh.pop %v1803
  %v1855 = vtanh.pop %v1808
  %v1856 = vtanh.pop %v1811
  %v1857 = vtanh.pop %v1816
  %v1858 = vtanh.pop %v1819
  %v1859 = vtanh.pop %v1824
  %v1860 = vtanh.pop %v1827
  %v1861 = vtanh.pop %v1832
  %v1862 = vtanh.pop %v1835
  %v1863 = vtanh.pop %v1840
  %v1864 = vtanh.pop %v1843
  %v1865 = vtanh.pop %v1848
  %v1866 = vld [vmem:[%s13] sm:$0xf]
  %v1867 = vld [vmem:[%s13 + $0x4] sm:$0xf]
  %v1868 = vld [vmem:[%s13 + $0x8] sm:$0xf]
  %v1869 = vld [vmem:[%s13 + $0xc] sm:$0xf]
  %v1870 = vld [vmem:[%s13 + $0x10] sm:$0xf]
  %v1871 = vld [vmem:[%s13 + $0x14] sm:$0xf]
  %v1872 = vld [vmem:[%s13 + $0x18] sm:$0xf]
  %v1873 = vld [vmem:[%s13 + $0x1c] sm:$0xf]
  %v1874 = vld [vmem:[%s13 + $0x20] sm:$0xf]
  %v1875 = vld [vmem:[%s13 + $0x24] sm:$0xf]
  %v1876 = vld [vmem:[%s13 + $0x28] sm:$0xf]
  %v1877 = vld [vmem:[%s13 + $0x2c] sm:$0xf]
  %v1878 = vld [vmem:[%s13 + $0x30] sm:$0xf]
  %v1879 = vld [vmem:[%s13 + $0x34] sm:$0xf]
  %v1880 = vld [vmem:[%s13 + $0x38] sm:$0xf]
  %v1881 = vld [vmem:[%s13 + $0x3c] sm:$0xf]
  %v1882 = vld [vmem:[%s13 + $0x40] sm:$0xf]
  %v1883 = vld [vmem:[%s13 + $0x44] sm:$0xf]
  %v1884 = vld [vmem:[%s13 + $0x48] sm:$0xf]
  %v1885 = vld [vmem:[%s13 + $0x4c] sm:$0xf]
  %v1886 = vld [vmem:[%s13 + $0x50] sm:$0xf]
  %v1887 = vld [vmem:[%s13 + $0x54] sm:$0xf]
  %v1888 = vld [vmem:[%s13 + $0x58] sm:$0xf]
  %v1889 = vld [vmem:[%s13 + $0x5c] sm:$0xf]
  %v1890 = vld [vmem:[%s13 + $0x60] sm:$0xf]
  %v1891 = vld [vmem:[%s14] sm:$0xff]
  %v1892 = vld [vmem:[%s14 + $0x8] sm:$0xff]
  %v1893 = vld [vmem:[%s14 + $0x10] sm:$0xff]
  %v1894 = vld [vmem:[%s14 + $0x18] sm:$0xff]
  %v1895 = vld [vmem:[%s14 + $0x20] sm:$0xff]
  %v1896 = vld [vmem:[%s14 + $0x28] sm:$0xff]
  %v1897 = vld [vmem:[%s14 + $0x30] sm:$0xff]
  %v1898 = vld [vmem:[%s14 + $0x38] sm:$0xff]
  %v1899 = vld [vmem:[%s14 + $0x40] sm:$0xff]
  %v1900 = vld [vmem:[%s14 + $0x48] sm:$0xff]
  %v1901 = vld [vmem:[%s14 + $0x50] sm:$0xff]
  %v1902 = vld [vmem:[%s14 + $0x58] sm:$0xff]
  %v1903 = vld [vmem:[%s14 + $0x60] sm:$0xff]
  %v1904 = vld [vmem:[%s14 + $0x68] sm:$0xff]
  %v1905 = vld [vmem:[%s14 + $0x70] sm:$0xff]
  %v1906 = vld [vmem:[%s14 + $0x78] sm:$0xff]
  %v1907 = vld [vmem:[%s14 + $0x80] sm:$0xff]
  %v1908 = vld [vmem:[%s14 + $0x88] sm:$0xff]
  %v1909 = vld [vmem:[%s14 + $0x90] sm:$0xff]
  %v1910 = vld [vmem:[%s14 + $0x98] sm:$0xff]
  %v1911 = vld [vmem:[%s14 + $0xa0] sm:$0xff]
  %v1912 = vld [vmem:[%s14 + $0xa8] sm:$0xff]
  %v1913 = vld [vmem:[%s14 + $0xb0] sm:$0xff]
  %v1914 = vld [vmem:[%s14 + $0xb8] sm:$0xff]
  %v1915 = vld [vmem:[%s14 + $0xc0] sm:$0xff]
  %v1916 = vpack.c.bf16 %v1854, %v1853
  %v1917 = vpack.c.bf16 %v1856, %v1855
  %v1918 = vpack.c.bf16 %v1858, %v1857
  %v1919 = vpack.c.bf16 %v1860, %v1859
  %v1920 = vpack.c.bf16 %v1862, %v1861
  %v1921 = vpack.c.bf16 %v1864, %v1863
  %v1922 = vpack.c.bf16 %v1865, %v1865
  %1924 = vset.pattern.permute.xlu0 0
  %1925 = vperm.xlu0 %1924, %v1891
  %v1926 = vpop.permute.xlu0 %1925
  %1929 = vset.pattern.permute.xlu0 0
  %1930 = vperm.xlu0 %1929, %v1892
  %v1931 = vpop.permute.xlu0 %1930
  %1934 = vset.pattern.permute.xlu0 0
  %1935 = vperm.xlu0 %1934, %v1893
  %v1936 = vpop.permute.xlu0 %1935
  %1939 = vset.pattern.permute.xlu0 0
  %1940 = vperm.xlu0 %1939, %v1894
  %v1941 = vpop.permute.xlu0 %1940
  %1944 = vset.pattern.permute.xlu0 0
  %1945 = vperm.xlu0 %1944, %v1895
  %v1946 = vpop.permute.xlu0 %1945
  %1949 = vset.pattern.permute.xlu0 0
  %1950 = vperm.xlu0 %1949, %v1896
  %v1951 = vpop.permute.xlu0 %1950
  %1954 = vset.pattern.permute.xlu0 0
  %1955 = vperm.xlu0 %1954, %v1897
  %v1956 = vpop.permute.xlu0 %1955
  %1959 = vset.pattern.permute.xlu0 0
  %1960 = vperm.xlu0 %1959, %v1898
  %v1961 = vpop.permute.xlu0 %1960
  %1964 = vset.pattern.permute.xlu0 0
  %1965 = vperm.xlu0 %1964, %v1899
  %v1966 = vpop.permute.xlu0 %1965
  %1969 = vset.pattern.permute.xlu0 0
  %1970 = vperm.xlu0 %1969, %v1900
  %v1971 = vpop.permute.xlu0 %1970
  %1974 = vset.pattern.permute.xlu0 0
  %1975 = vperm.xlu0 %1974, %v1901
  %v1976 = vpop.permute.xlu0 %1975
  %1979 = vset.pattern.permute.xlu0 0
  %1980 = vperm.xlu0 %1979, %v1902
  %v1981 = vpop.permute.xlu0 %1980
  %1984 = vset.pattern.permute.xlu0 0
  %1985 = vperm.xlu0 %1984, %v1903
  %v1986 = vpop.permute.xlu0 %1985
  %1989 = vset.pattern.permute.xlu0 0
  %1990 = vperm.xlu0 %1989, %v1904
  %v1991 = vpop.permute.xlu0 %1990
  %1994 = vset.pattern.permute.xlu0 0
  %1995 = vperm.xlu0 %1994, %v1905
  %v1996 = vpop.permute.xlu0 %1995
  %1999 = vset.pattern.permute.xlu0 0
  %2000 = vperm.xlu0 %1999, %v1906
  %v2001 = vpop.permute.xlu0 %2000
  %2004 = vset.pattern.permute.xlu0 0
  %2005 = vperm.xlu0 %2004, %v1907
  %v2006 = vpop.permute.xlu0 %2005
  %2009 = vset.pattern.permute.xlu0 0
  %2010 = vperm.xlu0 %2009, %v1908
  %v2011 = vpop.permute.xlu0 %2010
  %2014 = vset.pattern.permute.xlu0 0
  %2015 = vperm.xlu0 %2014, %v1909
  %v2016 = vpop.permute.xlu0 %2015
  %2019 = vset.pattern.permute.xlu0 0
  %2020 = vperm.xlu0 %2019, %v1910
  %v2021 = vpop.permute.xlu0 %2020
  %2024 = vset.pattern.permute.xlu0 0
  %2025 = vperm.xlu0 %2024, %v1911
  %v2026 = vpop.permute.xlu0 %2025
  %2029 = vset.pattern.permute.xlu0 0
  %2030 = vperm.xlu0 %2029, %v1912
  %v2031 = vpop.permute.xlu0 %2030
  %2034 = vset.pattern.permute.xlu0 0
  %2035 = vperm.xlu0 %2034, %v1913
  %v2036 = vpop.permute.xlu0 %2035
  %2039 = vset.pattern.permute.xlu0 0
  %2040 = vperm.xlu0 %2039, %v1914
  %v2041 = vpop.permute.xlu0 %2040
  %2044 = vset.pattern.permute.xlu0 0
  %2045 = vperm.xlu0 %2044, %v1915
  %v2046 = vpop.permute.xlu0 %2045
  %v2073 = vunpack.c.l.b16 %v1866
  %v2074 = vunpack.c.l.b16 %v1867
  %v2075 = vunpack.c.l.b16 %v1868
  %v2076 = vunpack.c.l.b16 %v1869
  %v2077 = vunpack.c.l.b16 %v1870
  %v2078 = vunpack.c.l.b16 %v1871
  %v2079 = vunpack.c.l.b16 %v1872
  %v2080 = vunpack.c.l.b16 %v1873
  %v2081 = vunpack.c.l.b16 %v1874
  %v2082 = vunpack.c.l.b16 %v1875
  %v2083 = vunpack.c.l.b16 %v1876
  %v2084 = vunpack.c.l.b16 %v1877
  %v2085 = vunpack.c.l.b16 %v1878
  %v2086 = vunpack.c.l.b16 %v1879
  %v2087 = vunpack.c.l.b16 %v1880
  %v2088 = vunpack.c.l.b16 %v1881
  %v2089 = vunpack.c.l.b16 %v1882
  %v2090 = vunpack.c.l.b16 %v1883
  %v2091 = vunpack.c.l.b16 %v1884
  %v2092 = vunpack.c.l.b16 %v1885
  %v2093 = vunpack.c.l.b16 %v1886
  %v2094 = vunpack.c.l.b16 %v1887
  %v2095 = vunpack.c.l.b16 %v1888
  %v2096 = vunpack.c.l.b16 %v1889
  %v2097 = vunpack.c.l.b16 %v1890
  %v2098 = vpack.c.b16 %v2074, %v2073
  %v2099 = vpack.c.b16 %v2076, %v2075
  %v2100 = vpack.c.b16 %v2078, %v2077
  %v2101 = vpack.c.b16 %v2080, %v2079
  %v2102 = vpack.c.b16 %v2082, %v2081
  %v2103 = vpack.c.b16 %v2084, %v2083
  %v2104 = vpack.c.b16 %v2086, %v2085
  %v2105 = vpack.c.b16 %v2088, %v2087
  %v2106 = vpack.c.b16 %v2090, %v2089
  %v2107 = vpack.c.b16 %v2092, %v2091
  %v2108 = vpack.c.b16 %v2094, %v2093
  %v2109 = vpack.c.b16 %v2096, %v2095
  %v2110 = vpack.c.b16 %v2097, %v2097
  %v2112 = vsel %vm1264, %v2098, 0
  %v2115 = vsel %vm1264, %v2099, 0
  %v2118 = vsel %vm1264, %v2100, 0
  %v2121 = vsel %vm1264, %v2101, 0
  %v2124 = vsel %vm1264, %v2102, 0
  %v2127 = vsel %vm1264, %v2103, 0
  %v2130 = vsel %vm1264, %v2104, 0
  %v2133 = vsel %vm1264, %v2105, 0
  %v2136 = vsel %vm1264, %v2106, 0
  %v2139 = vsel %vm1264, %v2107, 0
  %v2142 = vsel %vm1264, %v2108, 0
  %v2145 = vsel %vm1264, %v2109, 0
  %v2148 = vsel %vm1264, %v2110, 0
  %v2151 = vsel %vm1277, %v1922, 0
  %2153 = vmatprep.subr.bf16.mxu0 0
  %2154 = vmatpush1.bf16.msra.mxu0 %v1916
  %2155 = vmatprep.subr.bf16.mxu0 0
  %2156 = vmatpush1.bf16.msra.mxu0 %v1917
  %2157 = vmatprep.subr.bf16.mxu0 0
  %2158 = vmatpush1.bf16.msra.mxu0 %v1918
  %2159 = vmatprep.subr.bf16.mxu0 0
  %2160 = vmatpush1.bf16.msra.mxu0 %v1919
  %2161 = vmatprep.subr.bf16.mxu0 0
  %2162 = vmatpush1.bf16.msra.mxu0 %v1920
  %2163 = vmatprep.subr.bf16.mxu0 0
  %2164 = vmatpush1.bf16.msra.mxu0 %v1921
  %2165 = vmatprep.subr.bf16.mxu0 0
  %2166 = vmatpush1.bf16.msra.mxu0 %v2151
  %2167 = vmatprep.subr.bf16.mxu0 0
  %2168 = vmatpush1.bf16.msra.mxu0 0
  %2169 = vmatprep.subr.bf16.mxu0 0
  %2170 = vmatpush1.bf16.msra.mxu0 0
  %2171 = vmatprep.subr.bf16.mxu0 0
  %2172 = vmatpush1.bf16.msra.mxu0 0
  %2173 = vmatprep.subr.bf16.mxu0 0
  %2174 = vmatpush1.bf16.msra.mxu0 0
  %2175 = vmatprep.subr.bf16.mxu0 0
  %2176 = vmatpush1.bf16.msra.mxu0 0
  %2177 = vmatprep.subr.bf16.mxu0 0
  %2178 = vmatpush1.bf16.msra.mxu0 0
  %2179 = vmatprep.subr.bf16.mxu0 0
  %2180 = vmatpush1.bf16.msra.mxu0 0
  %2181 = vmatprep.subr.bf16.mxu0 0
  %2182 = vmatpush1.bf16.msra.mxu0 0
  %2183 = vmatprep.subr.bf16.mxu0 0
  %2184 = vmatpush1.bf16.msra.mxu0 0
  %2185 = vmatprep.mubr.bf16.mxu0 0
  %2186 = vmatmul.mubr.bf16.gmra.mrb[0].mxu0 %v2112
  %v2187 = vpop.f32.mrb[0].mxu0
  %v2188 = vadd.f32 %v1926, %v2187
  %v2189 = vpop.f32.mrb[0].mxu0
  %v2190 = vpop.f32.mrb[0].mxu0
  %v2191 = vadd.f32 %v1931, %v2190
  %v2192 = vpop.f32.mrb[0].mxu0
  %2193 = vmatprep.mubr.bf16.mxu0 0
  %2194 = vmatmul.mubr.bf16.gmra.mrb[0].mxu0 %v2115
  %v2195 = vpop.f32.mrb[0].mxu0
  %v2196 = vadd.f32 %v1936, %v2195
  %v2197 = vpop.f32.mrb[0].mxu0
  %v2198 = vpop.f32.mrb[0].mxu0
  %v2199 = vadd.f32 %v1941, %v2198
  %v2200 = vpop.f32.mrb[0].mxu0
  %2201 = vmatprep.mubr.bf16.mxu0 0
  %2202 = vmatmul.mubr.bf16.gmra.mrb[0].mxu0 %v2118
  %v2203 = vpop.f32.mrb[0].mxu0
  %v2204 = vadd.f32 %v1946, %v2203
  %v2205 = vpop.f32.mrb[0].mxu0
  %v2206 = vpop.f32.mrb[0].mxu0
  %v2207 = vadd.f32 %v1951, %v2206
  %v2208 = vpop.f32.mrb[0].mxu0
  %2209 = vmatprep.mubr.bf16.mxu0 0
  %2210 = vmatmul.mubr.bf16.gmra.mrb[0].mxu0 %v2121
  %v2211 = vpop.f32.mrb[0].mxu0
  %v2212 = vadd.f32 %v1956, %v2211
  %v2213 = vpop.f32.mrb[0].mxu0
  %v2214 = vpop.f32.mrb[0].mxu0
  %v2215 = vadd.f32 %v1961, %v2214
  %v2216 = vpop.f32.mrb[0].mxu0
  %2217 = vmatprep.mubr.bf16.mxu0 0
  %2218 = vmatmul.mubr.bf16.gmra.mrb[0].mxu0 %v2124
  %v2219 = vpop.f32.mrb[0].mxu0
  %v2220 = vadd.f32 %v1966, %v2219
  %v2221 = vpop.f32.mrb[0].mxu0
  %v2222 = vpop.f32.mrb[0].mxu0
  %v2223 = vadd.f32 %v1971, %v2222
  %v2224 = vpop.f32.mrb[0].mxu0
  %2225 = vmatprep.mubr.bf16.mxu0 0
  %2226 = vmatmul.mubr.bf16.gmra.mrb[0].mxu0 %v2127
  %v2227 = vpop.f32.mrb[0].mxu0
  %v2228 = vadd.f32 %v1976, %v2227
  %v2229 = vpop.f32.mrb[0].mxu0
  %v2230 = vpop.f32.mrb[0].mxu0
  %v2231 = vadd.f32 %v1981, %v2230
  %v2232 = vpop.f32.mrb[0].mxu0
  %2233 = vmatprep.mubr.bf16.mxu0 0
  %2234 = vmatmul.mubr.bf16.gmra.mrb[0].mxu0 %v2130
  %v2235 = vpop.f32.mrb[0].mxu0
  %v2236 = vadd.f32 %v1986, %v2235
  %v2237 = vpop.f32.mrb[0].mxu0
  %v2238 = vpop.f32.mrb[0].mxu0
  %v2239 = vadd.f32 %v1991, %v2238
  %v2240 = vpop.f32.mrb[0].mxu0
  %2241 = vmatprep.mubr.bf16.mxu0 0
  %2242 = vmatmul.mubr.bf16.gmra.mrb[0].mxu0 %v2133
  %v2243 = vpop.f32.mrb[0].mxu0
  %v2244 = vadd.f32 %v1996, %v2243
  %v2245 = vpop.f32.mrb[0].mxu0
  %v2246 = vpop.f32.mrb[0].mxu0
  %v2247 = vadd.f32 %v2001, %v2246
  %v2248 = vpop.f32.mrb[0].mxu0
  %2249 = vmatprep.mubr.bf16.mxu0 0
  %2250 = vmatmul.mubr.bf16.gmra.mrb[0].mxu0 %v2136
  %v2251 = vpop.f32.mrb[0].mxu0
  %v2252 = vadd.f32 %v2006, %v2251
  %v2253 = vpop.f32.mrb[0].mxu0
  %v2254 = vpop.f32.mrb[0].mxu0
  %v2255 = vadd.f32 %v2011, %v2254
  %v2256 = vpop.f32.mrb[0].mxu0
  %2257 = vmatprep.mubr.bf16.mxu0 0
  %2258 = vmatmul.mubr.bf16.gmra.mrb[0].mxu0 %v2139
  %v2259 = vpop.f32.mrb[0].mxu0
  %v2260 = vadd.f32 %v2016, %v2259
  %v2261 = vpop.f32.mrb[0].mxu0
  %v2262 = vpop.f32.mrb[0].mxu0
  %v2263 = vadd.f32 %v2021, %v2262
  %v2264 = vpop.f32.mrb[0].mxu0
  %2265 = vmatprep.mubr.bf16.mxu0 0
  %2266 = vmatmul.mubr.bf16.gmra.mrb[0].mxu0 %v2142
  %v2267 = vpop.f32.mrb[0].mxu0
  %v2268 = vadd.f32 %v2026, %v2267
  %v2269 = vpop.f32.mrb[0].mxu0
  %v2270 = vpop.f32.mrb[0].mxu0
  %v2271 = vadd.f32 %v2031, %v2270
  %v2272 = vpop.f32.mrb[0].mxu0
  %2273 = vmatprep.mubr.bf16.mxu0 0
  %2274 = vmatmul.mubr.bf16.gmra.mrb[0].mxu0 %v2145
  %v2275 = vpop.f32.mrb[0].mxu0
  %v2276 = vadd.f32 %v2036, %v2275
  %v2277 = vpop.f32.mrb[0].mxu0
  %v2278 = vpop.f32.mrb[0].mxu0
  %v2279 = vadd.f32 %v2041, %v2278
  %v2280 = vpop.f32.mrb[0].mxu0
  %2281 = vmatprep.mubr.bf16.mxu0 0
  %2282 = vmatmul.mubr.bf16.gmra.mrb[0].mxu0 %v2148
  %v2283 = vpop.f32.mrb[0].mxu0
  %v2284 = vadd.f32 %v2046, %v2283
  %v2285 = vpop.f32.mrb[0].mxu0
  %v2286 = vpop.f32.mrb[0].mxu0
  %v2287 = vpop.f32.mrb[0].mxu0
  %2288 = vdwg.mxu0
  %v2289 = vtanh.pop %v2188
  %v2290 = vtanh.pop %v2191
  %v2291 = vtanh.pop %v2196
  %v2292 = vtanh.pop %v2199
  %v2293 = vtanh.pop %v2204
  %v2294 = vtanh.pop %v2207
  %v2295 = vtanh.pop %v2212
  %v2296 = vtanh.pop %v2215
  %v2297 = vtanh.pop %v2220
  %v2298 = vtanh.pop %v2223
  %v2299 = vtanh.pop %v2228
  %v2300 = vtanh.pop %v2231
  %v2301 = vtanh.pop %v2236
  %v2302 = vtanh.pop %v2239
  %v2303 = vtanh.pop %v2244
  %v2304 = vtanh.pop %v2247
  %v2305 = vtanh.pop %v2252
  %v2306 = vtanh.pop %v2255
  %v2307 = vtanh.pop %v2260
  %v2308 = vtanh.pop %v2263
  %v2309 = vtanh.pop %v2268
  %v2310 = vtanh.pop %v2271
  %v2311 = vtanh.pop %v2276
  %v2312 = vtanh.pop %v2279
  %v2313 = vtanh.pop %v2284
  %v2314 = vld [vmem:[%s15] sm:$0xf]
  %v2315 = vld [vmem:[%s16] sm:$0xf]
  %v2316 = vpack.c.bf16 %v2290, %v2289
  %v2317 = vpack.c.bf16 %v2292, %v2291
  %v2318 = vpack.c.bf16 %v2294, %v2293
  %v2319 = vpack.c.bf16 %v2296, %v2295
  %v2320 = vpack.c.bf16 %v2298, %v2297
  %v2321 = vpack.c.bf16 %v2300, %v2299
  %v2322 = vpack.c.bf16 %v2302, %v2301
  %v2323 = vpack.c.bf16 %v2304, %v2303
  %v2324 = vpack.c.bf16 %v2306, %v2305
  %v2325 = vpack.c.bf16 %v2308, %v2307
  %v2326 = vpack.c.bf16 %v2310, %v2309
  %v2327 = vpack.c.bf16 %v2312, %v2311
  %v2328 = vpack.c.bf16 %v2313, %v2313
  %2330 = vset.pattern.permute.xlu0 0
  %2331 = vperm.xlu0 %2330, %v2315
  %v2332 = vpop.permute.xlu0 %2331
  %v2336 = vunpack.c.l.s4 1983009808
  %v2337 = vunpack.c.0.s8 %v2336
  %v2338 = vlaneseq
  %v2339 = vshrl.u32 %v2338, 7
  %v2340 = vsub.s32 %v2337, %v2339
  %v2341 = vrot.slane %v2314, %v2340
  %v2342 = vcombine.high %v2341, %v2341
  %v2345 = vsel %vm1063, %v2342, 0
  %v2348 = vsel %vm1085, %v2328, 0
  %2350 = vmatprep.subr.bf16.mxu0 0
  %2351 = vmatpush1.bf16.msra.mxu0 %v2316
  %2352 = vmatprep.subr.bf16.mxu0 0
  %2353 = vmatpush1.bf16.msra.mxu0 %v2317
  %2354 = vmatprep.subr.bf16.mxu0 0
  %2355 = vmatpush1.bf16.msra.mxu0 %v2318
  %2356 = vmatprep.subr.bf16.mxu0 0
  %2357 = vmatpush1.bf16.msra.mxu0 %v2319
  %2358 = vmatprep.subr.bf16.mxu0 0
  %2359 = vmatpush1.bf16.msra.mxu0 %v2320
  %2360 = vmatprep.subr.bf16.mxu0 0
  %2361 = vmatpush1.bf16.msra.mxu0 %v2321
  %2362 = vmatprep.subr.bf16.mxu0 0
  %2363 = vmatpush1.bf16.msra.mxu0 %v2322
  %2364 = vmatprep.subr.bf16.mxu0 0
  %2365 = vmatpush1.bf16.msra.mxu0 %v2323
  %2366 = vmatprep.subr.bf16.mxu0 0
  %2367 = vmatpush1.bf16.msra.mxu0 %v2324
  %2368 = vmatprep.subr.bf16.mxu0 0
  %2369 = vmatpush1.bf16.msra.mxu0 %v2325
  %2370 = vmatprep.subr.bf16.mxu0 0
  %2371 = vmatpush1.bf16.msra.mxu0 %v2326
  %2372 = vmatprep.subr.bf16.mxu0 0
  %2373 = vmatpush1.bf16.msra.mxu0 %v2327
  %2374 = vmatprep.subr.bf16.mxu0 0
  %2375 = vmatpush1.bf16.msra.mxu0 %v2348
  %2376 = vmatprep.subr.bf16.mxu0 0
  %2377 = vmatpush1.bf16.msra.mxu0 0
  %2378 = vmatprep.subr.bf16.mxu0 0
  %2379 = vmatpush1.bf16.msra.mxu0 0
  %2380 = vmatprep.subr.bf16.mxu0 0
  %2381 = vmatpush1.bf16.msra.mxu0 0
  %2382 = vmatprep.mubr.bf16.mxu0 %v2345
  %2383 = vmatmul.mubr.bf16.gmra.mrb[0].mxu0 %v2341
  %v2384 = vpop.f32.mrb[0].mxu0
  %v2385 = vadd.f32 %v2332, %v2384
  %v2386 = vpop.f32.mrb[0].mxu0
  %v2387 = vpop.f32.mrb[0].mxu0
  %v2388 = vpop.f32.mrb[0].mxu0
  %2389 = vdwg.mxu0
  %2390 = vst [vmem:[%s17] sm:$0xf] %v2385
  // Predicated region
  $region70: #{ae_3d_200_forward.1} parent=0 // pred_check
    _
  $region71: #{ae_3d_200_forward.1} parent=0 // pred_check_branch
    %2392 = sbr.rel (0) target = $region73
  $region72: #{ae_3d_200_forward.1} parent=0 // pred_region
    _
  $region73: #{ae_3d_200_forward.1} parent=0 // pred_fallthru
    _
  // Predicated region
  $region74: #{ae_3d_200_forward.1} parent=0 // pred_check
    _
  $region75: #{ae_3d_200_forward.1} parent=0 // pred_check_branch
    %2394 = sbr.rel (0) target = $region77
  $region76: #{ae_3d_200_forward.1} parent=0 // pred_region
    _
  $region77: #{ae_3d_200_forward.1} parent=0 // pred_fallthru
    _

</llo_original>
